<compile_context>
chip_gen: v5e
topology: v5e:2x2
jax: 0.10.0
libtpu: 0.0.40
codegen_flags: <defaults>
</compile_context>

<pallas_src>
import jax
import jax.numpy as jnp
from jax.experimental import pallas as pl
from jax.experimental.pallas import tpu as pltpu

_TILE_B = 512     # batch rows per grid step (multiple of 128, multiple of 8)
_LANES = 128


def _valuenet_kernel(x_ref, w1_ref, b1_ref, w2_ref, b2_ref, o_ref):
    # x_ref: (TB, S)   w1_ref: (S, HP)   b1_ref, w2_ref: (1, HP)
    # b2_ref: (1, 1) in SMEM             o_ref: (1, TB) lane-dense output row
    h = jnp.dot(x_ref[...], w1_ref[...],
                preferred_element_type=jnp.float32)      # MXU: (TB, HP)
    h = jnp.maximum(h + b1_ref[...], 0.0)                # VPU bias + ReLU
    # fc2 has a single output unit -> VPU multiply + lane reduce avoids an
    # N=1 vmatmul push/pop round-trip; VALU/XLU slots are otherwise idle here.
    y = jnp.sum(h * w2_ref[...], axis=-1)                # (TB,)
    y = y + b2_ref[0, 0]                                 # SMEM scalar bias
    o_ref[...] = y[None, :].astype(o_ref.dtype)          # lane-dense store


@jax.jit
def value_net_forward(x, w1, b1, w2, b2):
    """x: (B, S) f32; w1: (S, H); b1: (1, H); w2: (H, 1); b2: (1, 1).
    Weights use (in, out) layout (transpose of torch Linear.weight).
    Returns (B, 1) f32 = fc2(relu(fc1(x)))."""
    B, S = x.shape
    H = w1.shape[1]
    HP = ((H + _LANES - 1) // _LANES) * _LANES                 # hidden -> 128 lanes
    TB = min(_TILE_B, ((B + _LANES - 1) // _LANES) * _LANES)   # tile rows (x128)
    BP = ((B + TB - 1) // TB) * TB                             # padded batch

    f32 = jnp.float32
    # Zero-padding the hidden dim keeps the output bit-identical:
    # relu(0 + 0) = 0 and the padded w2 entries are 0.
    w1p = jnp.zeros((S, HP), f32).at[:, :H].set(w1.astype(f32))
    b1p = jnp.zeros((1, HP), f32).at[:, :H].set(b1.reshape(1, H).astype(f32))
    w2r = jnp.zeros((1, HP), f32).at[:, :H].set(w2.reshape(1, H).astype(f32))
    b2s = b2.reshape(1, 1).astype(f32)
    xp = jnp.zeros((BP, S), f32).at[:B].set(x.astype(f32))     # pad batch rows

    grid = (BP // TB,)
    cost = pl.CostEstimate(
        flops=2 * BP * S * HP + 4 * BP * HP,
        transcendentals=0,
        bytes_accessed=4 * (BP * S + S * HP + 2 * HP + 1 + BP),
    )

    out_row = pl.pallas_call(
        _valuenet_kernel,
        out_shape=jax.ShapeDtypeStruct((1, BP), f32),
        grid=grid,
        in_specs=[
            pl.BlockSpec((TB, S), lambda i: (i, 0)),             # stream x tiles
            pl.BlockSpec((S, HP), lambda i: (0, 0)),             # resident weights
            pl.BlockSpec((1, HP), lambda i: (0, 0)),             # resident b1
            pl.BlockSpec((1, HP), lambda i: (0, 0)),             # resident w2 row
            pl.BlockSpec(memory_space=pltpu.MemorySpace.SMEM),   # b2 scalar in SMEM
        ],
        out_specs=pl.BlockSpec((1, TB), lambda i: (0, i)),       # lane-dense output
        compiler_params=pltpu.CompilerParams(
            dimension_semantics=("parallel",)),                  # shard batch over TCs
        cost_estimate=cost,
    )(xp, w1p, b1p, w2r, b2s)

    return out_row[0, :B].reshape(B, 1)


def init_params(key, state_dim, hidden_dim):
    """Deterministic init mirroring torch.nn.Linear default U(-1/sqrt(fan_in), +)."""
    k1, k2, k3, k4 = jax.random.split(key, 4)
    bound1 = 1.0 / jnp.sqrt(jnp.float32(state_dim))
    bound2 = 1.0 / jnp.sqrt(jnp.float32(hidden_dim))
    # Stored as (in, out) = transpose of PyTorch's (out, in) weight layout.
    w1 = jax.random.uniform(k1, (state_dim, hidden_dim), jnp.float32, -bound1, bound1)
    b1 = jax.random.uniform(k2, (1, hidden_dim), jnp.float32, -bound1, bound1)
    w2 = jax.random.uniform(k3, (hidden_dim, 1), jnp.float32, -bound2, bound2)
    b2 = jax.random.uniform(k4, (1, 1), jnp.float32, -bound2, bound2)
    return w1, b1, w2, b2


if __name__ == "__main__":
    state_dim, hidden_dim = 4, 32
    batch = 1024          # PPO-minibatch-sized batch: amortizes kernel launch cost

    key = jax.random.PRNGKey(0)
    kx, kp = jax.random.split(key)
    x = jax.random.normal(kx, (batch, state_dim), jnp.float32)
    w1, b1, w2, b2 = init_params(kp, state_dim, hidden_dim)

    out = value_net_forward(x, w1, b1, w2, b2)
    jax.block_until_ready(out)

    # Reference in plain JAX (same math as the PyTorch forward).
    ref = jnp.maximum(x @ w1 + b1, 0.0) @ w2 + b2
    assert out.shape == (batch, 1)
    assert jnp.allclose(out, ref, atol=1e-5, rtol=1e-5)

    # Small, non-tile-multiple batch exercises the padding path.
    out_small = value_net_forward(x[:8], w1, b1, w2, b2)
    jax.block_until_ready(out_small)
    assert out_small.shape == (8, 1)
    assert jnp.allclose(out_small, ref[:8], atol=1e-5, rtol=1e-5)

    print("KERNEL_OK")
</pallas_src>

<mosaic_0001>
module attributes {stable_mosaic.version = 11 : i64} {
  func.func @_valuenet_kernel(%arg0: i32, %arg1: memref<512x4xf32, #tpu.memory_space<vmem>>, %arg2: memref<4x128xf32, #tpu.memory_space<vmem>>, %arg3: memref<1x128xf32, #tpu.memory_space<vmem>>, %arg4: memref<1x128xf32, #tpu.memory_space<vmem>>, %arg5: memref<1x1xf32, #tpu.memory_space<smem>>, %arg6: memref<1x512xf32, #tpu.memory_space<vmem>>) attributes {dimension_semantics = [#tpu.dimension_semantics<parallel>], iteration_bounds = array<i64: 2>, scalar_prefetch = 0 : i64, scratch_operands = 0 : i64, tpu.core_type = #tpu.core_type<tc>, window_params = [{transform_indices = @transform_0, window_bounds = array<i64: 512, 4>}, {pipeline_mode = #tpu.pipeline_mode<synchronous>, transform_indices = @transform_1, window_bounds = array<i64: 4, 128>}, {pipeline_mode = #tpu.pipeline_mode<synchronous>, transform_indices = @transform_2, window_bounds = array<i64: 1, 128>}, {pipeline_mode = #tpu.pipeline_mode<synchronous>, transform_indices = @transform_3, window_bounds = array<i64: 1, 128>}, {transform_indices = @transform_4, window_bounds = array<i64: 1, 1>}, {transform_indices = @transform_5, window_bounds = array<i64: 1, 512>}]} {
    %c0 = arith.constant 0 : index
    %c0_0 = arith.constant 0 : index
    %0 = vector.load %arg1[%c0, %c0_0] : memref<512x4xf32, #tpu.memory_space<vmem>>, vector<512x4xf32>
    %c0_1 = arith.constant 0 : index
    %c0_2 = arith.constant 0 : index
    %1 = vector.load %arg2[%c0_1, %c0_2] : memref<4x128xf32, #tpu.memory_space<vmem>>, vector<4x128xf32>
    %cst = arith.constant dense<0.000000e+00> : vector<512x128xf32>
    %2 = tpu.matmul %0, %1, %cst {dimension_numbers = #tpu.dot_dimension_numbers<[1], [0], [0], [1], [0, 0, 1, 1], [], []>} : vector<512x4xf32>, vector<4x128xf32>, vector<512x128xf32> -> vector<512x128xf32>
    %c0_3 = arith.constant 0 : index
    %c0_4 = arith.constant 0 : index
    %3 = vector.load %arg3[%c0_3, %c0_4] : memref<1x128xf32, #tpu.memory_space<vmem>>, vector<1x128xf32>
    %4 = vector.broadcast %3 : vector<1x128xf32> to vector<512x128xf32>
    %5 = arith.addf %2, %4 : vector<512x128xf32>
    %cst_5 = arith.constant 0.000000e+00 : f32
    %6 = vector.broadcast %cst_5 : f32 to vector<512x128xf32>
    %7 = arith.maximumf %5, %6 : vector<512x128xf32>
    %c0_6 = arith.constant 0 : index
    %c0_7 = arith.constant 0 : index
    %8 = vector.load %arg4[%c0_6, %c0_7] : memref<1x128xf32, #tpu.memory_space<vmem>>, vector<1x128xf32>
    %9 = vector.broadcast %8 : vector<1x128xf32> to vector<512x128xf32>
    %10 = arith.mulf %7, %9 : vector<512x128xf32>
    %cst_8 = arith.constant dense<0.000000e+00> : vector<512xf32>
    %11 = vector.multi_reduction <add>, %10, %cst_8 [1] : vector<512x128xf32> to vector<512xf32>
    %c0_9 = arith.constant 0 : index
    %c0_10 = arith.constant 0 : index
    %12 = memref.load %arg5[%c0_9, %c0_10] : memref<1x1xf32, #tpu.memory_space<smem>>
    %13 = vector.broadcast %12 : f32 to vector<512xf32>
    %14 = arith.addf %11, %13 : vector<512xf32>
    %15 = vector.shape_cast %14 : vector<512xf32> to vector<1x512xf32>
    %c0_11 = arith.constant 0 : index
    %c0_12 = arith.constant 0 : index
    %16 = vector.load %arg6[%c0_11, %c0_12] : memref<1x512xf32, #tpu.memory_space<vmem>>, vector<1x512xf32>
    tpu.vector_store %arg6[%c0_11, %c0_12], %15 {strides = array<i32>} : memref<1x512xf32, #tpu.memory_space<vmem>>, vector<1x512xf32>,
    return
  }
  func.func @transform_0(%arg0: i32) -> (i32, i32) {
    %c0_i32 = arith.constant 0 : i32
    %c0_i32_0 = arith.constant 0 : i32
    return %arg0, %c0_i32 : i32, i32
  }
  func.func @transform_1(%arg0: i32) -> (i32, i32) {
    %c0_i32 = arith.constant 0 : i32
    %c0_i32_0 = arith.constant 0 : i32
    %c0_i32_1 = arith.constant 0 : i32
    return %c0_i32, %c0_i32_0 : i32, i32
  }
  func.func @transform_2(%arg0: i32) -> (i32, i32) {
    %c0_i32 = arith.constant 0 : i32
    %c0_i32_0 = arith.constant 0 : i32
    %c0_i32_1 = arith.constant 0 : i32
    return %c0_i32, %c0_i32_0 : i32, i32
  }
  func.func @transform_3(%arg0: i32) -> (i32, i32) {
    %c0_i32 = arith.constant 0 : i32
    %c0_i32_0 = arith.constant 0 : i32
    %c0_i32_1 = arith.constant 0 : i32
    return %c0_i32, %c0_i32_0 : i32, i32
  }
  func.func @transform_4(%arg0: i32) -> (i32, i32) {
    %c0_i32 = arith.constant 0 : i32
    %c0_i32_0 = arith.constant 0 : i32
    %c0_i32_1 = arith.constant 0 : i32
    return %c0_i32, %c0_i32_0 : i32, i32
  }
  func.func @transform_5(%arg0: i32) -> (i32, i32) {
    %c0_i32 = arith.constant 0 : i32
    %c0_i32_0 = arith.constant 0 : i32
    return %c0_i32, %arg0 : i32, i32
  }
}

</mosaic_0001>

<llo_original>
// kernel: value_net_forward.1
$region0: #{value_net_forward.1}
  #allocation0 [shape = 'u32[]', space=smem, size = 0x4, offset = 0x4, fixed_abs, tag = 'smem constant byte address 0x4 - core index']
  #allocation1 [shape = 'u32[72,128]{1,0:T(1,128)}', space=vmem, size = 0x9000, scoped, tag = 'internal scratch']
  #allocation2 [shape = 'f32[1,1]{1,0:T(1,128)S(6)}', space=smem, size = 0x200, scoped, tag = 'scoped memory for value_net_forward.1']
  %s0 = inlined_call_operand.vmem [shape: f32[1024,4], index: 0, kind: input, shape index: {}]
  %s1 = inlined_call_operand.vmem [shape: f32[4,128], index: 1, kind: input, shape index: {}]
  %s2 = inlined_call_operand.vmem [shape: f32[1,128], index: 2, kind: input, shape index: {}]
  %s3 = inlined_call_operand.vmem [shape: f32[1,128], index: 3, kind: input, shape index: {}]
  %s4 = inlined_call_operand.<no memory space> [shape: f32[1,1], index: 4, kind: input, shape index: {}]
  %s5 = inlined_call_operand.hbm [shape: f32[1,1024], index: 5, kind: output, shape index: {}]
  %s6 = sld [smem:[#allocation0]]
  $region53: #{value_net_forward.1} parent=0
    _
  %s8 = ssub.s32 1, %s6
  %s9 = scalar_select 0, %s8, %s6
  %10 = sst [smem:[#allocation2]] %s4
  $region1: #{value_net_forward.1} parent=0
    #allocation3 [shape = 'u8[4096]{0}', space=vmem, size = 0x1000, scoped, tag = 'output window, operand 0']
    #allocation4 [shape = 's32[2]{0}', space=sflag, size = 0x8, scoped, tag = 'scoped memory for value_net_forward.1']
    %11 = vsyncpa [#allocation4], 0
    %s12 = scalar_lea.sflag [#allocation4], 1
    %13 = vsyncpa %s12, 0
    loop: start=0, step=1, limit=4
    $region2: #{value_net_forward.1} parent=1 // loop_pre_header
      _
    $region3: #{value_net_forward.1} parent=1 // loop_header
      %s15 = sphi 0, %s19
      %p16 = scmp.ge.s32.totalorder %s15, 4
      %s25 = sphi 0, %s27
      %s28 = sphi 0, %s25
      %s29 = sphi 0, %s28
      %s45 = sphi 0, %s29
      %s49 = sphi 0, %s49
      %s51 = sphi 0, %s49
      %s52 = sphi 0, %s51
      %s66 = sphi 0, %s52
      %s70 = sphi 0, %s70
      %s72 = sphi 0, %s70
      %s73 = sphi 0, %s72
      %s87 = sphi 0, %s73
      %s91 = sphi 0, %s91
      %s93 = sphi 0, %s91
      %s94 = sphi 0, %s93
      %s108 = sphi 0, %s94
      %s112 = sphi 0, %s112
      %s114 = sphi 0, %s112
      %s115 = sphi 0, %s114
      %s129 = sphi 0, %s115
      %s135 = sphi 0, %s137
      %s138 = sphi 0, %s135
      %s139 = sphi 0, %s138
      %s155 = sphi 0, %s139
    $region4: #{value_net_forward.1} parent=1 // loop_header_branch
      %18 = sbr.rel (%p16) target = $region8
    $region5: #{value_net_forward.1} parent=1 // loop_body
      %s20 = ssub.s32 %s15, 1
      %s21 = ssub.s32 %s15, 2
      %s22 = sadd.s32 %s15, 1
      %s23 = ssub.s32 %s15, %s22
      %p24 = scmp.eq.s32.totalorder %s23, 0
      %s26 = sadd.s32 %s25, 1
      %s27 = scalar_select %p24, %s25, %s26
      %p30 = pneg %p24
      %p31 = scmp.eq.s32.totalorder %s15, 1
      %p32 = por %p30, %p31
      %p33 = scmp.ne.s32.totalorder %s25, %s28
      %p34 = scmp.eq.s32.totalorder %s15, 0
      %p35 = por %p33, %p34
      %p36 = scmp.ne.s32.totalorder %s25, %s28
      %p37 = scmp.eq.s32.totalorder %s20, 1
      %p38 = por %p36, %p37
      %p39 = scmp.ne.s32.totalorder %s28, %s29
      %p40 = scmp.eq.s32.totalorder %s20, 0
      %p41 = por %p39, %p40
      %p42 = scmp.ne.s32.totalorder %s28, %s29
      %p43 = scmp.eq.s32.totalorder %s21, 1
      %p44 = por %p42, %p43
      %p46 = scmp.ne.s32.totalorder %s29, %s45
      %p47 = scmp.eq.s32.totalorder %s21, 0
      %p48 = por %p46, %p47
      %s50 = sadd.s32 %s49, 1
      %p53 = scmp.eq.s32.totalorder %s15, 1
      %p54 = scmp.ne.s32.totalorder %s49, %s51
      %p55 = scmp.eq.s32.totalorder %s15, 0
      %p56 = por %p54, %p55
      %p57 = scmp.ne.s32.totalorder %s49, %s51
      %p58 = scmp.eq.s32.totalorder %s20, 1
      %p59 = por %p57, %p58
      %p60 = scmp.ne.s32.totalorder %s51, %s52
      %p61 = scmp.eq.s32.totalorder %s20, 0
      %p62 = por %p60, %p61
      %p63 = scmp.ne.s32.totalorder %s51, %s52
      %p64 = scmp.eq.s32.totalorder %s21, 1
      %p65 = por %p63, %p64
      %p67 = scmp.ne.s32.totalorder %s52, %s66
      %p68 = scmp.eq.s32.totalorder %s21, 0
      %p69 = por %p67, %p68
      %s71 = sadd.s32 %s70, 1
      %p74 = scmp.eq.s32.totalorder %s15, 1
      %p75 = scmp.ne.s32.totalorder %s70, %s72
      %p76 = scmp.eq.s32.totalorder %s15, 0
      %p77 = por %p75, %p76
      %p78 = scmp.ne.s32.totalorder %s70, %s72
      %p79 = scmp.eq.s32.totalorder %s20, 1
      %p80 = por %p78, %p79
      %p81 = scmp.ne.s32.totalorder %s72, %s73
      %p82 = scmp.eq.s32.totalorder %s20, 0
      %p83 = por %p81, %p82
      %p84 = scmp.ne.s32.totalorder %s72, %s73
      %p85 = scmp.eq.s32.totalorder %s21, 1
      %p86 = por %p84, %p85
      %p88 = scmp.ne.s32.totalorder %s73, %s87
      %p89 = scmp.eq.s32.totalorder %s21, 0
      %p90 = por %p88, %p89
      %s92 = sadd.s32 %s91, 1
      %p95 = scmp.eq.s32.totalorder %s15, 1
      %p96 = scmp.ne.s32.totalorder %s91, %s93
      %p97 = scmp.eq.s32.totalorder %s15, 0
      %p98 = por %p96, %p97
      %p99 = scmp.ne.s32.totalorder %s91, %s93
      %p100 = scmp.eq.s32.totalorder %s20, 1
      %p101 = por %p99, %p100
      %p102 = scmp.ne.s32.totalorder %s93, %s94
      %p103 = scmp.eq.s32.totalorder %s20, 0
      %p104 = por %p102, %p103
      %p105 = scmp.ne.s32.totalorder %s93, %s94
      %p106 = scmp.eq.s32.totalorder %s21, 1
      %p107 = por %p105, %p106
      %p109 = scmp.ne.s32.totalorder %s94, %s108
      %p110 = scmp.eq.s32.totalorder %s21, 0
      %p111 = por %p109, %p110
      %s113 = sadd.s32 %s112, 1
      %p116 = scmp.eq.s32.totalorder %s15, 1
      %p117 = scmp.ne.s32.totalorder %s112, %s114
      %p118 = scmp.eq.s32.totalorder %s15, 0
      %p119 = por %p117, %p118
      %p120 = scmp.ne.s32.totalorder %s112, %s114
      %p121 = scmp.eq.s32.totalorder %s20, 1
      %p122 = por %p120, %p121
      %p123 = scmp.ne.s32.totalorder %s114, %s115
      %p124 = scmp.eq.s32.totalorder %s20, 0
      %p125 = por %p123, %p124
      %p126 = scmp.ne.s32.totalorder %s114, %s115
      %p127 = scmp.eq.s32.totalorder %s21, 1
      %p128 = por %p126, %p127
      %p130 = scmp.ne.s32.totalorder %s115, %s129
      %p131 = scmp.eq.s32.totalorder %s21, 0
      %p132 = por %p130, %p131
      %s133 = ssub.s32 %s15, %s22
      %p134 = scmp.eq.s32.totalorder %s133, 0
      %s136 = sadd.s32 %s135, 1
      %s137 = scalar_select %p134, %s135, %s136
      %p140 = pneg %p134
      %p141 = scmp.eq.s32.totalorder %s15, 1
      %p142 = por %p140, %p141
      %p143 = scmp.ne.s32.totalorder %s135, %s138
      %p144 = scmp.eq.s32.totalorder %s15, 0
      %p145 = por %p143, %p144
      %p146 = scmp.ne.s32.totalorder %s135, %s138
      %p147 = scmp.eq.s32.totalorder %s20, 1
      %p148 = por %p146, %p147
      %p149 = scmp.ne.s32.totalorder %s138, %s139
      %p150 = scmp.eq.s32.totalorder %s20, 0
      %p151 = por %p149, %p150
      %p152 = scmp.ne.s32.totalorder %s138, %s139
      %p153 = scmp.eq.s32.totalorder %s21, 1
      %p154 = por %p152, %p153
      %p156 = scmp.ne.s32.totalorder %s139, %s155
      %p157 = scmp.eq.s32.totalorder %s21, 0
      %p158 = por %p156, %p157
      %p159 = scmp.le.s32.totalorder 1, %s15
      %p160 = scmp.lt.s32.totalorder %s15, 3
      %p161 = pnand %p159, %p160
      %p162 = pneg %p161
      // Predicated region
      $region9: #{value_net_forward.1} parent=5 // pred_check
        _
      $region10: #{value_net_forward.1} parent=5 // pred_check_branch
        %164 = sbr.rel (%p161) target = $region12
      $region11: #{value_net_forward.1} parent=5 // pred_region
        %s165 = ssub.s32 %s15, 1
        // Predicated region
        $region13: #{value_net_forward.1} parent=11 // pred_check
          %p166 = pneg %p62
        $region14: #{value_net_forward.1} parent=11 // pred_check_branch
          %168 = sbr.rel (%p166) target = $region16
        $region15: #{value_net_forward.1} parent=11 // pred_region
          _
        $region16: #{value_net_forward.1} parent=11 // pred_fallthru
          _
        // Predicated region
        $region17: #{value_net_forward.1} parent=11 // pred_check
          %p169 = pneg %p83
        $region18: #{value_net_forward.1} parent=11 // pred_check_branch
          %171 = sbr.rel (%p169) target = $region20
        $region19: #{value_net_forward.1} parent=11 // pred_region
          _
        $region20: #{value_net_forward.1} parent=11 // pred_fallthru
          _
        // Predicated region
        $region21: #{value_net_forward.1} parent=11 // pred_check
          %p172 = pneg %p104
        $region22: #{value_net_forward.1} parent=11 // pred_check_branch
          %174 = sbr.rel (%p172) target = $region24
        $region23: #{value_net_forward.1} parent=11 // pred_region
          _
        $region24: #{value_net_forward.1} parent=11 // pred_fallthru
          _
        // Predicated region
        $region25: #{value_net_forward.1} parent=11 // pred_check
          %p175 = pneg %p125
        $region26: #{value_net_forward.1} parent=11 // pred_check_branch
          %177 = sbr.rel (%p175) target = $region28
        $region27: #{value_net_forward.1} parent=11 // pred_region
          _
        $region28: #{value_net_forward.1} parent=11 // pred_fallthru
          _
      $region12: #{value_net_forward.1} parent=5 // pred_fallthru
        _
      %p178 = scmp.lt.s32.totalorder %s15, 2
      // Predicated region
      $region29: #{value_net_forward.1} parent=5 // pred_check
        %p179 = pneg %p178
      $region30: #{value_net_forward.1} parent=5 // pred_check_branch
        %181 = sbr.rel (%p179) target = $region32
      $region31: #{value_net_forward.1} parent=5 // pred_region
        // Predicated region
        $region33: #{value_net_forward.1} parent=31 // pred_check
          %p182 = pneg %p35
        $region34: #{value_net_forward.1} parent=31 // pred_check_branch
          %184 = sbr.rel (%p182) target = $region36
        $region35: #{value_net_forward.1} parent=31 // pred_region
          %s185 = smul.u32 64, %s15
          %p186 = scmp.lt.s32.totalorder %s185, 127
          %s187 = scalar_select %p186, %s185, 127
          %s188 = smul.addr %s187, 8
          %s189 = scalar_lea.vmem %s0, %s188
          %s190 = smul.u32 64, %s15
        $region36: #{value_net_forward.1} parent=31 // pred_fallthru
          _
      $region32: #{value_net_forward.1} parent=5 // pred_fallthru
        _
      %p191 = scmp.le.s32.totalorder 1, %s15
      %p192 = scmp.lt.s32.totalorder %s15, 3
      %p193 = pnand %p191, %p192
      %p194 = pneg %p193
      // Predicated region
      $region37: #{value_net_forward.1} parent=5 // pred_check
        _
      $region38: #{value_net_forward.1} parent=5 // pred_check_branch
        %196 = sbr.rel (%p193) target = $region40
      $region39: #{value_net_forward.1} parent=5 // pred_region
        %s197 = ssub.s32 %s15, 1
        %s198 = smul.u32 64, %s20
        %p199 = scmp.lt.s32.totalorder %s198, 127
        %s200 = scalar_select %p199, %s198, 127
        %s201 = smul.addr %s200, 8
        %s202 = scalar_lea.vmem %s0, %s201
        %p203 = pneg %p41
        %p204 = pneg %p38
        %p205 = pneg %p62
        %p206 = pneg %p59
        %p207 = pneg %p83
        %p208 = pneg %p80
        %p209 = pneg %p104
        %p210 = pneg %p101
        %p211 = pneg %p125
        %p212 = pneg %p122
        %p213 = pneg %p151
        %p214 = pneg %p148
        %s215 = sand.u32 %s138, 1
        %s216 = scalar_lea.sflag [#allocation4], %s215
        %s217 = sand.u32 %s138, 1
        %s218 = smul.addr %s217, 4
        %s219 = scalar_lea.vmem [#allocation3], %s218
        %s220 = smul.u32 64, %s20
        %p221 = scmp.lt.s32.totalorder %s220, 127
        %s222 = scalar_select %p221, %s220, 127
        %s223 = smul.addr %s222, 8
        %s224 = scalar_lea.vmem %s0, %s223
        %s225 = smul.u32 64, %s20
        %s226 = smul.u32 4, %s20
        %v227 = vld [vmem:[%s224] sm:$0xff]
        %v228 = vld [vmem:[%s224 + $0x8] sm:$0xff]
        %v229 = vld [vmem:[%s224 + $0x10] sm:$0xff]
        %v230 = vld [vmem:[%s224 + $0x18] sm:$0xff]
        %v231 = vld [vmem:[%s224 + $0x20] sm:$0xff]
        %v232 = vld [vmem:[%s224 + $0x28] sm:$0xff]
        %v233 = vld [vmem:[%s224 + $0x30] sm:$0xff]
        %v234 = vld [vmem:[%s224 + $0x38] sm:$0xff]
        %v235 = vld [vmem:[%s224 + $0x40] sm:$0xff]
        %v236 = vld [vmem:[%s224 + $0x48] sm:$0xff]
        %v237 = vld [vmem:[%s224 + $0x50] sm:$0xff]
        %v238 = vld [vmem:[%s224 + $0x58] sm:$0xff]
        %v239 = vld [vmem:[%s224 + $0x60] sm:$0xff]
        %v240 = vld [vmem:[%s224 + $0x68] sm:$0xff]
        %v241 = vld [vmem:[%s224 + $0x70] sm:$0xff]
        %v242 = vld [vmem:[%s224 + $0x78] sm:$0xff]
        %v243 = vld [vmem:[%s224 + $0x80] sm:$0xff]
        %v244 = vld [vmem:[%s224 + $0x88] sm:$0xff]
        %v245 = vld [vmem:[%s224 + $0x90] sm:$0xff]
        %v246 = vld [vmem:[%s224 + $0x98] sm:$0xff]
        %v247 = vld [vmem:[%s224 + $0xa0] sm:$0xff]
        %v248 = vld [vmem:[%s224 + $0xa8] sm:$0xff]
        %v249 = vld [vmem:[%s224 + $0xb0] sm:$0xff]
        %v250 = vld [vmem:[%s224 + $0xb8] sm:$0xff]
        %v251 = vld [vmem:[%s224 + $0xc0] sm:$0xff]
        %v252 = vld [vmem:[%s224 + $0xc8] sm:$0xff]
        %v253 = vld [vmem:[%s224 + $0xd0] sm:$0xff]
        %v254 = vld [vmem:[%s224 + $0xd8] sm:$0xff]
        %v255 = vld [vmem:[%s224 + $0xe0] sm:$0xff]
        %v256 = vld [vmem:[%s224 + $0xe8] sm:$0xff]
        %v257 = vld [vmem:[%s224 + $0xf0] sm:$0xff]
        %v258 = vld [vmem:[%s224 + $0xf8] sm:$0xff]
        %v259 = vld [vmem:[%s224 + $0x100] sm:$0xff]
        %v260 = vld [vmem:[%s224 + $0x108] sm:$0xff]
        %v261 = vld [vmem:[%s224 + $0x110] sm:$0xff]
        %v262 = vld [vmem:[%s224 + $0x118] sm:$0xff]
        %v263 = vld [vmem:[%s224 + $0x120] sm:$0xff]
        %v264 = vld [vmem:[%s224 + $0x128] sm:$0xff]
        %v265 = vld [vmem:[%s224 + $0x130] sm:$0xff]
        %v266 = vld [vmem:[%s224 + $0x138] sm:$0xff]
        %v267 = vld [vmem:[%s224 + $0x140] sm:$0xff]
        %v268 = vld [vmem:[%s224 + $0x148] sm:$0xff]
        %v269 = vld [vmem:[%s224 + $0x150] sm:$0xff]
        %v270 = vld [vmem:[%s224 + $0x158] sm:$0xff]
        %v271 = vld [vmem:[%s224 + $0x160] sm:$0xff]
        %v272 = vld [vmem:[%s224 + $0x168] sm:$0xff]
        %v273 = vld [vmem:[%s224 + $0x170] sm:$0xff]
        %v274 = vld [vmem:[%s224 + $0x178] sm:$0xff]
        %v275 = vld [vmem:[%s224 + $0x180] sm:$0xff]
        %v276 = vld [vmem:[%s224 + $0x188] sm:$0xff]
        %v277 = vld [vmem:[%s224 + $0x190] sm:$0xff]
        %v278 = vld [vmem:[%s224 + $0x198] sm:$0xff]
        %v279 = vld [vmem:[%s224 + $0x1a0] sm:$0xff]
        %v280 = vld [vmem:[%s224 + $0x1a8] sm:$0xff]
        %v281 = vld [vmem:[%s224 + $0x1b0] sm:$0xff]
        %v282 = vld [vmem:[%s224 + $0x1b8] sm:$0xff]
        %v283 = vld [vmem:[%s224 + $0x1c0] sm:$0xff]
        %v284 = vld [vmem:[%s224 + $0x1c8] sm:$0xff]
        %v285 = vld [vmem:[%s224 + $0x1d0] sm:$0xff]
        %v286 = vld [vmem:[%s224 + $0x1d8] sm:$0xff]
        %v287 = vld [vmem:[%s224 + $0x1e0] sm:$0xff]
        %v288 = vld [vmem:[%s224 + $0x1e8] sm:$0xff]
        %v289 = vld [vmem:[%s224 + $0x1f0] sm:$0xff]
        %v290 = vld [vmem:[%s224 + $0x1f8] sm:$0xff]
        %v291 = vld [vmem:[%s1] sm:$0xf]
        %v292 = vld [vmem:[%s2] sm:$0x1]
        %v294 = vperm.slane %v292, 0
        %vm296 = vcmask 31744
        %v298 = vsel %vm296, %v227, 0
        %v301 = vsel %vm296, %v228, 0
        %v304 = vsel %vm296, %v229, 0
        %v307 = vsel %vm296, %v230, 0
        %v310 = vsel %vm296, %v231, 0
        %v313 = vsel %vm296, %v232, 0
        %v316 = vsel %vm296, %v233, 0
        %v319 = vsel %vm296, %v234, 0
        %v322 = vsel %vm296, %v235, 0
        %v325 = vsel %vm296, %v236, 0
        %v328 = vsel %vm296, %v237, 0
        %v331 = vsel %vm296, %v238, 0
        %v334 = vsel %vm296, %v239, 0
        %v337 = vsel %vm296, %v240, 0
        %v340 = vsel %vm296, %v241, 0
        %v343 = vsel %vm296, %v242, 0
        %v346 = vsel %vm296, %v243, 0
        %v349 = vsel %vm296, %v244, 0
        %v352 = vsel %vm296, %v245, 0
        %v355 = vsel %vm296, %v246, 0
        %v358 = vsel %vm296, %v247, 0
        %v361 = vsel %vm296, %v248, 0
        %v364 = vsel %vm296, %v249, 0
        %v367 = vsel %vm296, %v250, 0
        %v370 = vsel %vm296, %v251, 0
        %v373 = vsel %vm296, %v252, 0
        %v376 = vsel %vm296, %v253, 0
        %v379 = vsel %vm296, %v254, 0
        %v382 = vsel %vm296, %v255, 0
        %v385 = vsel %vm296, %v256, 0
        %v388 = vsel %vm296, %v257, 0
        %v391 = vsel %vm296, %v258, 0
        %v394 = vsel %vm296, %v259, 0
        %v397 = vsel %vm296, %v260, 0
        %v400 = vsel %vm296, %v261, 0
        %v403 = vsel %vm296, %v262, 0
        %v406 = vsel %vm296, %v263, 0
        %v409 = vsel %vm296, %v264, 0
        %v412 = vsel %vm296, %v265, 0
        %v415 = vsel %vm296, %v266, 0
        %v418 = vsel %vm296, %v267, 0
        %v421 = vsel %vm296, %v268, 0
        %v424 = vsel %vm296, %v269, 0
        %v427 = vsel %vm296, %v270, 0
        %v430 = vsel %vm296, %v271, 0
        %v433 = vsel %vm296, %v272, 0
        %v436 = vsel %vm296, %v273, 0
        %v439 = vsel %vm296, %v274, 0
        %v442 = vsel %vm296, %v275, 0
        %v445 = vsel %vm296, %v276, 0
        %v448 = vsel %vm296, %v277, 0
        %v451 = vsel %vm296, %v278, 0
        %v454 = vsel %vm296, %v279, 0
        %v457 = vsel %vm296, %v280, 0
        %v460 = vsel %vm296, %v281, 0
        %v463 = vsel %vm296, %v282, 0
        %v466 = vsel %vm296, %v283, 0
        %v469 = vsel %vm296, %v284, 0
        %v472 = vsel %vm296, %v285, 0
        %v475 = vsel %vm296, %v286, 0
        %v478 = vsel %vm296, %v287, 0
        %v481 = vsel %vm296, %v288, 0
        %v484 = vsel %vm296, %v289, 0
        %v487 = vsel %vm296, %v290, 0
        %vm489 = vcmask 1043456
        %v491 = vsel %vm489, %v291, 0
        %493 = vmatpush.msra.mxu0 0.0
        %494 = vmatpush.msra.mxu0 0.0
        %495 = vmatpush.msra.mxu0 0.0
        %496 = vmatpush.msra.mxu0 0.0
        %497 = vmatpush.msra.mxu0 0.0
        %498 = vmatpush.msra.mxu0 0.0
        %499 = vmatpush.msra.mxu0 0.0
        %500 = vmatpush.msra.mxu0 0.0
        %501 = vmatpush.msra.mxu0 0.0
        %502 = vmatpush.msra.mxu0 0.0
        %503 = vmatpush.msra.mxu0 0.0
        %504 = vmatpush.msra.mxu0 0.0
        %505 = vmatpush.msra.mxu0 0.0
        %506 = vmatpush.msra.mxu0 0.0
        %507 = vmatpush.msra.mxu0 0.0
        %508 = vmatpush.msra.mxu0 %v491
        %509 = vmatmul.f32.gmra.mxu0 %v298
        %v510 = vpop.f32.mrf.mxu0
        %v511 = vadd.f32 %v294, %v510
        %512 = vmatmul.f32.gmra.mxu0 %v301
        %v513 = vpop.f32.mrf.mxu0
        %v514 = vadd.f32 %v294, %v513
        %515 = vmatmul.f32.gmra.mxu0 %v304
        %v516 = vpop.f32.mrf.mxu0
        %v517 = vadd.f32 %v294, %v516
        %518 = vmatmul.f32.gmra.mxu0 %v307
        %v519 = vpop.f32.mrf.mxu0
        %v520 = vadd.f32 %v294, %v519
        %521 = vmatmul.f32.gmra.mxu0 %v310
        %v522 = vpop.f32.mrf.mxu0
        %v523 = vadd.f32 %v294, %v522
        %524 = vmatmul.f32.gmra.mxu0 %v313
        %v525 = vpop.f32.mrf.mxu0
        %v526 = vadd.f32 %v294, %v525
        %527 = vmatmul.f32.gmra.mxu0 %v316
        %v528 = vpop.f32.mrf.mxu0
        %v529 = vadd.f32 %v294, %v528
        %530 = vmatmul.f32.gmra.mxu0 %v319
        %v531 = vpop.f32.mrf.mxu0
        %v532 = vadd.f32 %v294, %v531
        %533 = vmatmul.f32.gmra.mxu0 %v322
        %v534 = vpop.f32.mrf.mxu0
        %v535 = vadd.f32 %v294, %v534
        %536 = vmatmul.f32.gmra.mxu0 %v325
        %v537 = vpop.f32.mrf.mxu0
        %v538 = vadd.f32 %v294, %v537
        %539 = vmatmul.f32.gmra.mxu0 %v328
        %v540 = vpop.f32.mrf.mxu0
        %v541 = vadd.f32 %v294, %v540
        %542 = vmatmul.f32.gmra.mxu0 %v331
        %v543 = vpop.f32.mrf.mxu0
        %v544 = vadd.f32 %v294, %v543
        %545 = vmatmul.f32.gmra.mxu0 %v334
        %v546 = vpop.f32.mrf.mxu0
        %v547 = vadd.f32 %v294, %v546
        %548 = vmatmul.f32.gmra.mxu0 %v337
        %v549 = vpop.f32.mrf.mxu0
        %v550 = vadd.f32 %v294, %v549
        %551 = vmatmul.f32.gmra.mxu0 %v340
        %v552 = vpop.f32.mrf.mxu0
        %v553 = vadd.f32 %v294, %v552
        %554 = vmatmul.f32.gmra.mxu0 %v343
        %v555 = vpop.f32.mrf.mxu0
        %v556 = vadd.f32 %v294, %v555
        %557 = vmatmul.f32.gmra.mxu0 %v346
        %v558 = vpop.f32.mrf.mxu0
        %v559 = vadd.f32 %v294, %v558
        %560 = vmatmul.f32.gmra.mxu0 %v349
        %v561 = vpop.f32.mrf.mxu0
        %v562 = vadd.f32 %v294, %v561
        %563 = vmatmul.f32.gmra.mxu0 %v352
        %v564 = vpop.f32.mrf.mxu0
        %v565 = vadd.f32 %v294, %v564
        %566 = vmatmul.f32.gmra.mxu0 %v355
        %v567 = vpop.f32.mrf.mxu0
        %v568 = vadd.f32 %v294, %v567
        %569 = vmatmul.f32.gmra.mxu0 %v358
        %v570 = vpop.f32.mrf.mxu0
        %v571 = vadd.f32 %v294, %v570
        %572 = vmatmul.f32.gmra.mxu0 %v361
        %v573 = vpop.f32.mrf.mxu0
        %v574 = vadd.f32 %v294, %v573
        %575 = vmatmul.f32.gmra.mxu0 %v364
        %v576 = vpop.f32.mrf.mxu0
        %v577 = vadd.f32 %v294, %v576
        %578 = vmatmul.f32.gmra.mxu0 %v367
        %v579 = vpop.f32.mrf.mxu0
        %v580 = vadd.f32 %v294, %v579
        %581 = vmatmul.f32.gmra.mxu0 %v370
        %v582 = vpop.f32.mrf.mxu0
        %v583 = vadd.f32 %v294, %v582
        %584 = vmatmul.f32.gmra.mxu0 %v373
        %v585 = vpop.f32.mrf.mxu0
        %v586 = vadd.f32 %v294, %v585
        %587 = vmatmul.f32.gmra.mxu0 %v376
        %v588 = vpop.f32.mrf.mxu0
        %v589 = vadd.f32 %v294, %v588
        %590 = vmatmul.f32.gmra.mxu0 %v379
        %v591 = vpop.f32.mrf.mxu0
        %v592 = vadd.f32 %v294, %v591
        %593 = vmatmul.f32.gmra.mxu0 %v382
        %v594 = vpop.f32.mrf.mxu0
        %v595 = vadd.f32 %v294, %v594
        %596 = vmatmul.f32.gmra.mxu0 %v385
        %v597 = vpop.f32.mrf.mxu0
        %v598 = vadd.f32 %v294, %v597
        %599 = vmatmul.f32.gmra.mxu0 %v388
        %v600 = vpop.f32.mrf.mxu0
        %v601 = vadd.f32 %v294, %v600
        %602 = vmatmul.f32.gmra.mxu0 %v391
        %v603 = vpop.f32.mrf.mxu0
        %v604 = vadd.f32 %v294, %v603
        %605 = vmatmul.f32.gmra.mxu0 %v394
        %v606 = vpop.f32.mrf.mxu0
        %v607 = vadd.f32 %v294, %v606
        %608 = vmatmul.f32.gmra.mxu0 %v397
        %v609 = vpop.f32.mrf.mxu0
        %v610 = vadd.f32 %v294, %v609
        %611 = vmatmul.f32.gmra.mxu0 %v400
        %v612 = vpop.f32.mrf.mxu0
        %v613 = vadd.f32 %v294, %v612
        %614 = vmatmul.f32.gmra.mxu0 %v403
        %v615 = vpop.f32.mrf.mxu0
        %v616 = vadd.f32 %v294, %v615
        %617 = vmatmul.f32.gmra.mxu0 %v406
        %v618 = vpop.f32.mrf.mxu0
        %v619 = vadd.f32 %v294, %v618
        %620 = vmatmul.f32.gmra.mxu0 %v409
        %v621 = vpop.f32.mrf.mxu0
        %v622 = vadd.f32 %v294, %v621
        %623 = vmatmul.f32.gmra.mxu0 %v412
        %v624 = vpop.f32.mrf.mxu0
        %v625 = vadd.f32 %v294, %v624
        %626 = vmatmul.f32.gmra.mxu0 %v415
        %v627 = vpop.f32.mrf.mxu0
        %v628 = vadd.f32 %v294, %v627
        %629 = vmatmul.f32.gmra.mxu0 %v418
        %v630 = vpop.f32.mrf.mxu0
        %v631 = vadd.f32 %v294, %v630
        %632 = vmatmul.f32.gmra.mxu0 %v421
        %v633 = vpop.f32.mrf.mxu0
        %v634 = vadd.f32 %v294, %v633
        %635 = vmatmul.f32.gmra.mxu0 %v424
        %v636 = vpop.f32.mrf.mxu0
        %v637 = vadd.f32 %v294, %v636
        %638 = vmatmul.f32.gmra.mxu0 %v427
        %v639 = vpop.f32.mrf.mxu0
        %v640 = vadd.f32 %v294, %v639
        %641 = vmatmul.f32.gmra.mxu0 %v430
        %v642 = vpop.f32.mrf.mxu0
        %v643 = vadd.f32 %v294, %v642
        %644 = vmatmul.f32.gmra.mxu0 %v433
        %v645 = vpop.f32.mrf.mxu0
        %v646 = vadd.f32 %v294, %v645
        %647 = vmatmul.f32.gmra.mxu0 %v436
        %v648 = vpop.f32.mrf.mxu0
        %v649 = vadd.f32 %v294, %v648
        %650 = vmatmul.f32.gmra.mxu0 %v439
        %v651 = vpop.f32.mrf.mxu0
        %v652 = vadd.f32 %v294, %v651
        %653 = vmatmul.f32.gmra.mxu0 %v442
        %v654 = vpop.f32.mrf.mxu0
        %v655 = vadd.f32 %v294, %v654
        %656 = vmatmul.f32.gmra.mxu0 %v445
        %v657 = vpop.f32.mrf.mxu0
        %v658 = vadd.f32 %v294, %v657
        %659 = vmatmul.f32.gmra.mxu0 %v448
        %v660 = vpop.f32.mrf.mxu0
        %v661 = vadd.f32 %v294, %v660
        %662 = vmatmul.f32.gmra.mxu0 %v451
        %v663 = vpop.f32.mrf.mxu0
        %v664 = vadd.f32 %v294, %v663
        %665 = vmatmul.f32.gmra.mxu0 %v454
        %v666 = vpop.f32.mrf.mxu0
        %v667 = vadd.f32 %v294, %v666
        %668 = vmatmul.f32.gmra.mxu0 %v457
        %v669 = vpop.f32.mrf.mxu0
        %v670 = vadd.f32 %v294, %v669
        %671 = vmatmul.f32.gmra.mxu0 %v460
        %v672 = vpop.f32.mrf.mxu0
        %v673 = vadd.f32 %v294, %v672
        %674 = vmatmul.f32.gmra.mxu0 %v463
        %v675 = vpop.f32.mrf.mxu0
        %v676 = vadd.f32 %v294, %v675
        %677 = vmatmul.f32.gmra.mxu0 %v466
        %v678 = vpop.f32.mrf.mxu0
        %v679 = vadd.f32 %v294, %v678
        %680 = vmatmul.f32.gmra.mxu0 %v469
        %v681 = vpop.f32.mrf.mxu0
        %v682 = vadd.f32 %v294, %v681
        %683 = vmatmul.f32.gmra.mxu0 %v472
        %v684 = vpop.f32.mrf.mxu0
        %v685 = vadd.f32 %v294, %v684
        %686 = vmatmul.f32.gmra.mxu0 %v475
        %v687 = vpop.f32.mrf.mxu0
        %v688 = vadd.f32 %v294, %v687
        %689 = vmatmul.f32.gmra.mxu0 %v478
        %v690 = vpop.f32.mrf.mxu0
        %v691 = vadd.f32 %v294, %v690
        %692 = vmatmul.f32.gmra.mxu0 %v481
        %v693 = vpop.f32.mrf.mxu0
        %v694 = vadd.f32 %v294, %v693
        %695 = vmatmul.f32.gmra.mxu0 %v484
        %v696 = vpop.f32.mrf.mxu0
        %v697 = vadd.f32 %v294, %v696
        %698 = vmatmul.f32.gmra.mxu0 %v487
        %v699 = vpop.f32.mrf.mxu0
        %v700 = vadd.f32 %v294, %v699
        %701 = vdwg.mxu0
        %v702 = vmax.f32 %v511, 0.0
        %v703 = vmax.f32 %v514, 0.0
        %v704 = vmax.f32 %v517, 0.0
        %v705 = vmax.f32 %v520, 0.0
        %v706 = vmax.f32 %v523, 0.0
        %v707 = vmax.f32 %v526, 0.0
        %v708 = vmax.f32 %v529, 0.0
        %v709 = vmax.f32 %v532, 0.0
        %v710 = vmax.f32 %v535, 0.0
        %v711 = vmax.f32 %v538, 0.0
        %v712 = vmax.f32 %v541, 0.0
        %v713 = vmax.f32 %v544, 0.0
        %v714 = vmax.f32 %v547, 0.0
        %v715 = vmax.f32 %v550, 0.0
        %v716 = vmax.f32 %v553, 0.0
        %v717 = vmax.f32 %v556, 0.0
        %v718 = vmax.f32 %v559, 0.0
        %v719 = vmax.f32 %v562, 0.0
        %v720 = vmax.f32 %v565, 0.0
        %v721 = vmax.f32 %v568, 0.0
        %v722 = vmax.f32 %v571, 0.0
        %v723 = vmax.f32 %v574, 0.0
        %v724 = vmax.f32 %v577, 0.0
        %v725 = vmax.f32 %v580, 0.0
        %v726 = vmax.f32 %v583, 0.0
        %v727 = vmax.f32 %v586, 0.0
        %v728 = vmax.f32 %v589, 0.0
        %v729 = vmax.f32 %v592, 0.0
        %v730 = vmax.f32 %v595, 0.0
        %v731 = vmax.f32 %v598, 0.0
        %v732 = vmax.f32 %v601, 0.0
        %v733 = vmax.f32 %v604, 0.0
        %v734 = vmax.f32 %v607, 0.0
        %v735 = vmax.f32 %v610, 0.0
        %v736 = vmax.f32 %v613, 0.0
        %v737 = vmax.f32 %v616, 0.0
        %v738 = vmax.f32 %v619, 0.0
        %v739 = vmax.f32 %v622, 0.0
        %v740 = vmax.f32 %v625, 0.0
        %v741 = vmax.f32 %v628, 0.0
        %v742 = vmax.f32 %v631, 0.0
        %v743 = vmax.f32 %v634, 0.0
        %v744 = vmax.f32 %v637, 0.0
        %v745 = vmax.f32 %v640, 0.0
        %v746 = vmax.f32 %v643, 0.0
        %v747 = vmax.f32 %v646, 0.0
        %v748 = vmax.f32 %v649, 0.0
        %v749 = vmax.f32 %v652, 0.0
        %v750 = vmax.f32 %v655, 0.0
        %v751 = vmax.f32 %v658, 0.0
        %v752 = vmax.f32 %v661, 0.0
        %v753 = vmax.f32 %v664, 0.0
        %v754 = vmax.f32 %v667, 0.0
        %v755 = vmax.f32 %v670, 0.0
        %v756 = vmax.f32 %v673, 0.0
        %v757 = vmax.f32 %v676, 0.0
        %v758 = vmax.f32 %v679, 0.0
        %v759 = vmax.f32 %v682, 0.0
        %v760 = vmax.f32 %v685, 0.0
        %v761 = vmax.f32 %v688, 0.0
        %v762 = vmax.f32 %v691, 0.0
        %v763 = vmax.f32 %v694, 0.0
        %v764 = vmax.f32 %v697, 0.0
        %v765 = vmax.f32 %v700, 0.0
        %v766 = vld [vmem:[%s3] sm:$0x1]
        %v768 = vperm.slane %v766, 0
        %v770 = vmul.f32 %v702, %v768
        %v771 = vmul.f32 %v703, %v768
        %v772 = vmul.f32 %v704, %v768
        %v773 = vmul.f32 %v705, %v768
        %v774 = vmul.f32 %v706, %v768
        %v775 = vmul.f32 %v707, %v768
        %v776 = vmul.f32 %v708, %v768
        %v777 = vmul.f32 %v709, %v768
        %v778 = vmul.f32 %v710, %v768
        %v779 = vmul.f32 %v711, %v768
        %v780 = vmul.f32 %v712, %v768
        %v781 = vmul.f32 %v713, %v768
        %v782 = vmul.f32 %v714, %v768
        %v783 = vmul.f32 %v715, %v768
        %v784 = vmul.f32 %v716, %v768
        %v785 = vmul.f32 %v717, %v768
        %v786 = vmul.f32 %v718, %v768
        %v787 = vmul.f32 %v719, %v768
        %v788 = vmul.f32 %v720, %v768
        %v789 = vmul.f32 %v721, %v768
        %v790 = vmul.f32 %v722, %v768
        %v791 = vmul.f32 %v723, %v768
        %v792 = vmul.f32 %v724, %v768
        %v793 = vmul.f32 %v725, %v768
        %v794 = vmul.f32 %v726, %v768
        %v795 = vmul.f32 %v727, %v768
        %v796 = vmul.f32 %v728, %v768
        %v797 = vmul.f32 %v729, %v768
        %v798 = vmul.f32 %v730, %v768
        %v799 = vmul.f32 %v731, %v768
        %v800 = vmul.f32 %v732, %v768
        %v801 = vmul.f32 %v733, %v768
        %v802 = vmul.f32 %v734, %v768
        %v803 = vmul.f32 %v735, %v768
        %v804 = vmul.f32 %v736, %v768
        %v805 = vmul.f32 %v737, %v768
        %v806 = vmul.f32 %v738, %v768
        %v807 = vmul.f32 %v739, %v768
        %v808 = vmul.f32 %v740, %v768
        %v809 = vmul.f32 %v741, %v768
        %v810 = vmul.f32 %v742, %v768
        %v811 = vmul.f32 %v743, %v768
        %v812 = vmul.f32 %v744, %v768
        %v813 = vmul.f32 %v745, %v768
        %v814 = vmul.f32 %v746, %v768
        %v815 = vmul.f32 %v747, %v768
        %v816 = vmul.f32 %v748, %v768
        %v817 = vmul.f32 %v749, %v768
        %v818 = vmul.f32 %v750, %v768
        %v819 = vmul.f32 %v751, %v768
        %v820 = vmul.f32 %v752, %v768
        %v821 = vmul.f32 %v753, %v768
        %v822 = vmul.f32 %v754, %v768
        %v823 = vmul.f32 %v755, %v768
        %v824 = vmul.f32 %v756, %v768
        %v825 = vmul.f32 %v757, %v768
        %v826 = vmul.f32 %v758, %v768
        %v827 = vmul.f32 %v759, %v768
        %v828 = vmul.f32 %v760, %v768
        %v829 = vmul.f32 %v761, %v768
        %v830 = vmul.f32 %v762, %v768
        %v831 = vmul.f32 %v763, %v768
        %v832 = vmul.f32 %v764, %v768
        %v833 = vmul.f32 %v765, %v768
        %834 = vadd.xlane.f32.xlu0 %v770
        %v835 = vpop.xlane.xlu0 %834
        %836 = vadd.xlane.f32.xlu0 %v771
        %v837 = vpop.xlane.xlu0 %836
        %838 = vadd.xlane.f32.xlu0 %v772
        %v839 = vpop.xlane.xlu0 %838
        %840 = vadd.xlane.f32.xlu0 %v773
        %v841 = vpop.xlane.xlu0 %840
        %842 = vadd.xlane.f32.xlu0 %v774
        %v843 = vpop.xlane.xlu0 %842
        %844 = vadd.xlane.f32.xlu0 %v775
        %v845 = vpop.xlane.xlu0 %844
        %846 = vadd.xlane.f32.xlu0 %v776
        %v847 = vpop.xlane.xlu0 %846
        %848 = vadd.xlane.f32.xlu0 %v777
        %v849 = vpop.xlane.xlu0 %848
        %850 = vadd.xlane.f32.xlu0 %v778
        %v851 = vpop.xlane.xlu0 %850
        %852 = vadd.xlane.f32.xlu0 %v779
        %v853 = vpop.xlane.xlu0 %852
        %854 = vadd.xlane.f32.xlu0 %v780
        %v855 = vpop.xlane.xlu0 %854
        %856 = vadd.xlane.f32.xlu0 %v781
        %v857 = vpop.xlane.xlu0 %856
        %858 = vadd.xlane.f32.xlu0 %v782
        %v859 = vpop.xlane.xlu0 %858
        %860 = vadd.xlane.f32.xlu0 %v783
        %v861 = vpop.xlane.xlu0 %860
        %862 = vadd.xlane.f32.xlu0 %v784
        %v863 = vpop.xlane.xlu0 %862
        %864 = vadd.xlane.f32.xlu0 %v785
        %v865 = vpop.xlane.xlu0 %864
        %866 = vadd.xlane.f32.xlu0 %v786
        %v867 = vpop.xlane.xlu0 %866
        %868 = vadd.xlane.f32.xlu0 %v787
        %v869 = vpop.xlane.xlu0 %868
        %870 = vadd.xlane.f32.xlu0 %v788
        %v871 = vpop.xlane.xlu0 %870
        %872 = vadd.xlane.f32.xlu0 %v789
        %v873 = vpop.xlane.xlu0 %872
        %874 = vadd.xlane.f32.xlu0 %v790
        %v875 = vpop.xlane.xlu0 %874
        %876 = vadd.xlane.f32.xlu0 %v791
        %v877 = vpop.xlane.xlu0 %876
        %878 = vadd.xlane.f32.xlu0 %v792
        %v879 = vpop.xlane.xlu0 %878
        %880 = vadd.xlane.f32.xlu0 %v793
        %v881 = vpop.xlane.xlu0 %880
        %882 = vadd.xlane.f32.xlu0 %v794
        %v883 = vpop.xlane.xlu0 %882
        %884 = vadd.xlane.f32.xlu0 %v795
        %v885 = vpop.xlane.xlu0 %884
        %886 = vadd.xlane.f32.xlu0 %v796
        %v887 = vpop.xlane.xlu0 %886
        %888 = vadd.xlane.f32.xlu0 %v797
        %v889 = vpop.xlane.xlu0 %888
        %890 = vadd.xlane.f32.xlu0 %v798
        %v891 = vpop.xlane.xlu0 %890
        %892 = vadd.xlane.f32.xlu0 %v799
        %v893 = vpop.xlane.xlu0 %892
        %894 = vadd.xlane.f32.xlu0 %v800
        %v895 = vpop.xlane.xlu0 %894
        %896 = vadd.xlane.f32.xlu0 %v801
        %v897 = vpop.xlane.xlu0 %896
        %898 = vadd.xlane.f32.xlu0 %v802
        %v899 = vpop.xlane.xlu0 %898
        %900 = vadd.xlane.f32.xlu0 %v803
        %v901 = vpop.xlane.xlu0 %900
        %902 = vadd.xlane.f32.xlu0 %v804
        %v903 = vpop.xlane.xlu0 %902
        %904 = vadd.xlane.f32.xlu0 %v805
        %v905 = vpop.xlane.xlu0 %904
        %906 = vadd.xlane.f32.xlu0 %v806
        %v907 = vpop.xlane.xlu0 %906
        %908 = vadd.xlane.f32.xlu0 %v807
        %v909 = vpop.xlane.xlu0 %908
        %910 = vadd.xlane.f32.xlu0 %v808
        %v911 = vpop.xlane.xlu0 %910
        %912 = vadd.xlane.f32.xlu0 %v809
        %v913 = vpop.xlane.xlu0 %912
        %914 = vadd.xlane.f32.xlu0 %v810
        %v915 = vpop.xlane.xlu0 %914
        %916 = vadd.xlane.f32.xlu0 %v811
        %v917 = vpop.xlane.xlu0 %916
        %918 = vadd.xlane.f32.xlu0 %v812
        %v919 = vpop.xlane.xlu0 %918
        %920 = vadd.xlane.f32.xlu0 %v813
        %v921 = vpop.xlane.xlu0 %920
        %922 = vadd.xlane.f32.xlu0 %v814
        %v923 = vpop.xlane.xlu0 %922
        %924 = vadd.xlane.f32.xlu0 %v815
        %v925 = vpop.xlane.xlu0 %924
        %926 = vadd.xlane.f32.xlu0 %v816
        %v927 = vpop.xlane.xlu0 %926
        %928 = vadd.xlane.f32.xlu0 %v817
        %v929 = vpop.xlane.xlu0 %928
        %930 = vadd.xlane.f32.xlu0 %v818
        %v931 = vpop.xlane.xlu0 %930
        %932 = vadd.xlane.f32.xlu0 %v819
        %v933 = vpop.xlane.xlu0 %932
        %934 = vadd.xlane.f32.xlu0 %v820
        %v935 = vpop.xlane.xlu0 %934
        %936 = vadd.xlane.f32.xlu0 %v821
        %v937 = vpop.xlane.xlu0 %936
        %938 = vadd.xlane.f32.xlu0 %v822
        %v939 = vpop.xlane.xlu0 %938
        %940 = vadd.xlane.f32.xlu0 %v823
        %v941 = vpop.xlane.xlu0 %940
        %942 = vadd.xlane.f32.xlu0 %v824
        %v943 = vpop.xlane.xlu0 %942
        %944 = vadd.xlane.f32.xlu0 %v825
        %v945 = vpop.xlane.xlu0 %944
        %946 = vadd.xlane.f32.xlu0 %v826
        %v947 = vpop.xlane.xlu0 %946
        %948 = vadd.xlane.f32.xlu0 %v827
        %v949 = vpop.xlane.xlu0 %948
        %950 = vadd.xlane.f32.xlu0 %v828
        %v951 = vpop.xlane.xlu0 %950
        %952 = vadd.xlane.f32.xlu0 %v829
        %v953 = vpop.xlane.xlu0 %952
        %954 = vadd.xlane.f32.xlu0 %v830
        %v955 = vpop.xlane.xlu0 %954
        %956 = vadd.xlane.f32.xlu0 %v831
        %v957 = vpop.xlane.xlu0 %956
        %958 = vadd.xlane.f32.xlu0 %v832
        %v959 = vpop.xlane.xlu0 %958
        %960 = vadd.xlane.f32.xlu0 %v833
        %v961 = vpop.xlane.xlu0 %960
        %s962 = sld [smem:[#allocation2]]
        %v963 = vstv %s962
        %v964 = vadd.f32 %v835, %v963
        %v965 = vadd.f32 %v837, %v963
        %v966 = vadd.f32 %v839, %v963
        %v967 = vadd.f32 %v841, %v963
        %v968 = vadd.f32 %v843, %v963
        %v969 = vadd.f32 %v845, %v963
        %v970 = vadd.f32 %v847, %v963
        %v971 = vadd.f32 %v849, %v963
        %v972 = vadd.f32 %v851, %v963
        %v973 = vadd.f32 %v853, %v963
        %v974 = vadd.f32 %v855, %v963
        %v975 = vadd.f32 %v857, %v963
        %v976 = vadd.f32 %v859, %v963
        %v977 = vadd.f32 %v861, %v963
        %v978 = vadd.f32 %v863, %v963
        %v979 = vadd.f32 %v865, %v963
        %v980 = vadd.f32 %v867, %v963
        %v981 = vadd.f32 %v869, %v963
        %v982 = vadd.f32 %v871, %v963
        %v983 = vadd.f32 %v873, %v963
        %v984 = vadd.f32 %v875, %v963
        %v985 = vadd.f32 %v877, %v963
        %v986 = vadd.f32 %v879, %v963
        %v987 = vadd.f32 %v881, %v963
        %v988 = vadd.f32 %v883, %v963
        %v989 = vadd.f32 %v885, %v963
        %v990 = vadd.f32 %v887, %v963
        %v991 = vadd.f32 %v889, %v963
        %v992 = vadd.f32 %v891, %v963
        %v993 = vadd.f32 %v893, %v963
        %v994 = vadd.f32 %v895, %v963
        %v995 = vadd.f32 %v897, %v963
        %v996 = vadd.f32 %v899, %v963
        %v997 = vadd.f32 %v901, %v963
        %v998 = vadd.f32 %v903, %v963
        %v999 = vadd.f32 %v905, %v963
        %v1000 = vadd.f32 %v907, %v963
        %v1001 = vadd.f32 %v909, %v963
        %v1002 = vadd.f32 %v911, %v963
        %v1003 = vadd.f32 %v913, %v963
        %v1004 = vadd.f32 %v915, %v963
        %v1005 = vadd.f32 %v917, %v963
        %v1006 = vadd.f32 %v919, %v963
        %v1007 = vadd.f32 %v921, %v963
        %v1008 = vadd.f32 %v923, %v963
        %v1009 = vadd.f32 %v925, %v963
        %v1010 = vadd.f32 %v927, %v963
        %v1011 = vadd.f32 %v929, %v963
        %v1012 = vadd.f32 %v931, %v963
        %v1013 = vadd.f32 %v933, %v963
        %v1014 = vadd.f32 %v935, %v963
        %v1015 = vadd.f32 %v937, %v963
        %v1016 = vadd.f32 %v939, %v963
        %v1017 = vadd.f32 %v941, %v963
        %v1018 = vadd.f32 %v943, %v963
        %v1019 = vadd.f32 %v945, %v963
        %v1020 = vadd.f32 %v947, %v963
        %v1021 = vadd.f32 %v949, %v963
        %v1022 = vadd.f32 %v951, %v963
        %v1023 = vadd.f32 %v953, %v963
        %v1024 = vadd.f32 %v955, %v963
        %v1025 = vadd.f32 %v957, %v963
        %v1026 = vadd.f32 %v959, %v963
        %v1027 = vadd.f32 %v961, %v963
        %v1092 = vperm.slane %v964, 0
        %v1093 = vperm.slane %v964, 1
        %v1094 = vperm.slane %v964, 2
        %v1095 = vperm.slane %v964, 3
        %v1096 = vperm.slane %v964, 4
        %v1097 = vperm.slane %v964, 5
        %v1098 = vperm.slane %v964, 6
        %v1099 = vperm.slane %v964, 7
        %v1100 = vperm.slane %v965, 0
        %v1101 = vperm.slane %v965, 1
        %v1102 = vperm.slane %v965, 2
        %v1103 = vperm.slane %v965, 3
        %v1104 = vperm.slane %v965, 4
        %v1105 = vperm.slane %v965, 5
        %v1106 = vperm.slane %v965, 6
        %v1107 = vperm.slane %v965, 7
        %v1108 = vperm.slane %v966, 0
        %v1109 = vperm.slane %v966, 1
        %v1110 = vperm.slane %v966, 2
        %v1111 = vperm.slane %v966, 3
        %v1112 = vperm.slane %v966, 4
        %v1113 = vperm.slane %v966, 5
        %v1114 = vperm.slane %v966, 6
        %v1115 = vperm.slane %v966, 7
        %v1116 = vperm.slane %v967, 0
        %v1117 = vperm.slane %v967, 1
        %v1118 = vperm.slane %v967, 2
        %v1119 = vperm.slane %v967, 3
        %v1120 = vperm.slane %v967, 4
        %v1121 = vperm.slane %v967, 5
        %v1122 = vperm.slane %v967, 6
        %v1123 = vperm.slane %v967, 7
        %v1124 = vperm.slane %v968, 0
        %v1125 = vperm.slane %v968, 1
        %v1126 = vperm.slane %v968, 2
        %v1127 = vperm.slane %v968, 3
        %v1128 = vperm.slane %v968, 4
        %v1129 = vperm.slane %v968, 5
        %v1130 = vperm.slane %v968, 6
        %v1131 = vperm.slane %v968, 7
        %v1132 = vperm.slane %v969, 0
        %v1133 = vperm.slane %v969, 1
        %v1134 = vperm.slane %v969, 2
        %v1135 = vperm.slane %v969, 3
        %v1136 = vperm.slane %v969, 4
        %v1137 = vperm.slane %v969, 5
        %v1138 = vperm.slane %v969, 6
        %v1139 = vperm.slane %v969, 7
        %v1140 = vperm.slane %v970, 0
        %v1141 = vperm.slane %v970, 1
        %v1142 = vperm.slane %v970, 2
        %v1143 = vperm.slane %v970, 3
        %v1144 = vperm.slane %v970, 4
        %v1145 = vperm.slane %v970, 5
        %v1146 = vperm.slane %v970, 6
        %v1147 = vperm.slane %v970, 7
        %v1148 = vperm.slane %v971, 0
        %v1149 = vperm.slane %v971, 1
        %v1150 = vperm.slane %v971, 2
        %v1151 = vperm.slane %v971, 3
        %v1152 = vperm.slane %v971, 4
        %v1153 = vperm.slane %v971, 5
        %v1154 = vperm.slane %v971, 6
        %v1155 = vperm.slane %v971, 7
        %v1156 = vperm.slane %v972, 0
        %v1157 = vperm.slane %v972, 1
        %v1158 = vperm.slane %v972, 2
        %v1159 = vperm.slane %v972, 3
        %v1160 = vperm.slane %v972, 4
        %v1161 = vperm.slane %v972, 5
        %v1162 = vperm.slane %v972, 6
        %v1163 = vperm.slane %v972, 7
        %v1164 = vperm.slane %v973, 0
        %v1165 = vperm.slane %v973, 1
        %v1166 = vperm.slane %v973, 2
        %v1167 = vperm.slane %v973, 3
        %v1168 = vperm.slane %v973, 4
        %v1169 = vperm.slane %v973, 5
        %v1170 = vperm.slane %v973, 6
        %v1171 = vperm.slane %v973, 7
        %v1172 = vperm.slane %v974, 0
        %v1173 = vperm.slane %v974, 1
        %v1174 = vperm.slane %v974, 2
        %v1175 = vperm.slane %v974, 3
        %v1176 = vperm.slane %v974, 4
        %v1177 = vperm.slane %v974, 5
        %v1178 = vperm.slane %v974, 6
        %v1179 = vperm.slane %v974, 7
        %v1180 = vperm.slane %v975, 0
        %v1181 = vperm.slane %v975, 1
        %v1182 = vperm.slane %v975, 2
        %v1183 = vperm.slane %v975, 3
        %v1184 = vperm.slane %v975, 4
        %v1185 = vperm.slane %v975, 5
        %v1186 = vperm.slane %v975, 6
        %v1187 = vperm.slane %v975, 7
        %v1188 = vperm.slane %v976, 0
        %v1189 = vperm.slane %v976, 1
        %v1190 = vperm.slane %v976, 2
        %v1191 = vperm.slane %v976, 3
        %v1192 = vperm.slane %v976, 4
        %v1193 = vperm.slane %v976, 5
        %v1194 = vperm.slane %v976, 6
        %v1195 = vperm.slane %v976, 7
        %v1196 = vperm.slane %v977, 0
        %v1197 = vperm.slane %v977, 1
        %v1198 = vperm.slane %v977, 2
        %v1199 = vperm.slane %v977, 3
        %v1200 = vperm.slane %v977, 4
        %v1201 = vperm.slane %v977, 5
        %v1202 = vperm.slane %v977, 6
        %v1203 = vperm.slane %v977, 7
        %v1204 = vperm.slane %v978, 0
        %v1205 = vperm.slane %v978, 1
        %v1206 = vperm.slane %v978, 2
        %v1207 = vperm.slane %v978, 3
        %v1208 = vperm.slane %v978, 4
        %v1209 = vperm.slane %v978, 5
        %v1210 = vperm.slane %v978, 6
        %v1211 = vperm.slane %v978, 7
        %v1212 = vperm.slane %v979, 0
        %v1213 = vperm.slane %v979, 1
        %v1214 = vperm.slane %v979, 2
        %v1215 = vperm.slane %v979, 3
        %v1216 = vperm.slane %v979, 4
        %v1217 = vperm.slane %v979, 5
        %v1218 = vperm.slane %v979, 6
        %v1219 = vperm.slane %v979, 7
        %v1220 = vperm.slane %v980, 0
        %v1221 = vperm.slane %v980, 1
        %v1222 = vperm.slane %v980, 2
        %v1223 = vperm.slane %v980, 3
        %v1224 = vperm.slane %v980, 4
        %v1225 = vperm.slane %v980, 5
        %v1226 = vperm.slane %v980, 6
        %v1227 = vperm.slane %v980, 7
        %v1228 = vperm.slane %v981, 0
        %v1229 = vperm.slane %v981, 1
        %v1230 = vperm.slane %v981, 2
        %v1231 = vperm.slane %v981, 3
        %v1232 = vperm.slane %v981, 4
        %v1233 = vperm.slane %v981, 5
        %v1234 = vperm.slane %v981, 6
        %v1235 = vperm.slane %v981, 7
        %v1236 = vperm.slane %v982, 0
        %v1237 = vperm.slane %v982, 1
        %v1238 = vperm.slane %v982, 2
        %v1239 = vperm.slane %v982, 3
        %v1240 = vperm.slane %v982, 4
        %v1241 = vperm.slane %v982, 5
        %v1242 = vperm.slane %v982, 6
        %v1243 = vperm.slane %v982, 7
        %v1244 = vperm.slane %v983, 0
        %v1245 = vperm.slane %v983, 1
        %v1246 = vperm.slane %v983, 2
        %v1247 = vperm.slane %v983, 3
        %v1248 = vperm.slane %v983, 4
        %v1249 = vperm.slane %v983, 5
        %v1250 = vperm.slane %v983, 6
        %v1251 = vperm.slane %v983, 7
        %v1252 = vperm.slane %v984, 0
        %v1253 = vperm.slane %v984, 1
        %v1254 = vperm.slane %v984, 2
        %v1255 = vperm.slane %v984, 3
        %v1256 = vperm.slane %v984, 4
        %v1257 = vperm.slane %v984, 5
        %v1258 = vperm.slane %v984, 6
        %v1259 = vperm.slane %v984, 7
        %v1260 = vperm.slane %v985, 0
        %v1261 = vperm.slane %v985, 1
        %v1262 = vperm.slane %v985, 2
        %v1263 = vperm.slane %v985, 3
        %v1264 = vperm.slane %v985, 4
        %v1265 = vperm.slane %v985, 5
        %v1266 = vperm.slane %v985, 6
        %v1267 = vperm.slane %v985, 7
        %v1268 = vperm.slane %v986, 0
        %v1269 = vperm.slane %v986, 1
        %v1270 = vperm.slane %v986, 2
        %v1271 = vperm.slane %v986, 3
        %v1272 = vperm.slane %v986, 4
        %v1273 = vperm.slane %v986, 5
        %v1274 = vperm.slane %v986, 6
        %v1275 = vperm.slane %v986, 7
        %v1276 = vperm.slane %v987, 0
        %v1277 = vperm.slane %v987, 1
        %v1278 = vperm.slane %v987, 2
        %v1279 = vperm.slane %v987, 3
        %v1280 = vperm.slane %v987, 4
        %v1281 = vperm.slane %v987, 5
        %v1282 = vperm.slane %v987, 6
        %v1283 = vperm.slane %v987, 7
        %v1284 = vperm.slane %v988, 0
        %v1285 = vperm.slane %v988, 1
        %v1286 = vperm.slane %v988, 2
        %v1287 = vperm.slane %v988, 3
        %v1288 = vperm.slane %v988, 4
        %v1289 = vperm.slane %v988, 5
        %v1290 = vperm.slane %v988, 6
        %v1291 = vperm.slane %v988, 7
        %v1292 = vperm.slane %v989, 0
        %v1293 = vperm.slane %v989, 1
        %v1294 = vperm.slane %v989, 2
        %v1295 = vperm.slane %v989, 3
        %v1296 = vperm.slane %v989, 4
        %v1297 = vperm.slane %v989, 5
        %v1298 = vperm.slane %v989, 6
        %v1299 = vperm.slane %v989, 7
        %v1300 = vperm.slane %v990, 0
        %v1301 = vperm.slane %v990, 1
        %v1302 = vperm.slane %v990, 2
        %v1303 = vperm.slane %v990, 3
        %v1304 = vperm.slane %v990, 4
        %v1305 = vperm.slane %v990, 5
        %v1306 = vperm.slane %v990, 6
        %v1307 = vperm.slane %v990, 7
        %v1308 = vperm.slane %v991, 0
        %v1309 = vperm.slane %v991, 1
        %v1310 = vperm.slane %v991, 2
        %v1311 = vperm.slane %v991, 3
        %v1312 = vperm.slane %v991, 4
        %v1313 = vperm.slane %v991, 5
        %v1314 = vperm.slane %v991, 6
        %v1315 = vperm.slane %v991, 7
        %v1316 = vperm.slane %v992, 0
        %v1317 = vperm.slane %v992, 1
        %v1318 = vperm.slane %v992, 2
        %v1319 = vperm.slane %v992, 3
        %v1320 = vperm.slane %v992, 4
        %v1321 = vperm.slane %v992, 5
        %v1322 = vperm.slane %v992, 6
        %v1323 = vperm.slane %v992, 7
        %v1324 = vperm.slane %v993, 0
        %v1325 = vperm.slane %v993, 1
        %v1326 = vperm.slane %v993, 2
        %v1327 = vperm.slane %v993, 3
        %v1328 = vperm.slane %v993, 4
        %v1329 = vperm.slane %v993, 5
        %v1330 = vperm.slane %v993, 6
        %v1331 = vperm.slane %v993, 7
        %v1332 = vperm.slane %v994, 0
        %v1333 = vperm.slane %v994, 1
        %v1334 = vperm.slane %v994, 2
        %v1335 = vperm.slane %v994, 3
        %v1336 = vperm.slane %v994, 4
        %v1337 = vperm.slane %v994, 5
        %v1338 = vperm.slane %v994, 6
        %v1339 = vperm.slane %v994, 7
        %v1340 = vperm.slane %v995, 0
        %v1341 = vperm.slane %v995, 1
        %v1342 = vperm.slane %v995, 2
        %v1343 = vperm.slane %v995, 3
        %v1344 = vperm.slane %v995, 4
        %v1345 = vperm.slane %v995, 5
        %v1346 = vperm.slane %v995, 6
        %v1347 = vperm.slane %v995, 7
        %v1348 = vperm.slane %v996, 0
        %v1349 = vperm.slane %v996, 1
        %v1350 = vperm.slane %v996, 2
        %v1351 = vperm.slane %v996, 3
        %v1352 = vperm.slane %v996, 4
        %v1353 = vperm.slane %v996, 5
        %v1354 = vperm.slane %v996, 6
        %v1355 = vperm.slane %v996, 7
        %v1356 = vperm.slane %v997, 0
        %v1357 = vperm.slane %v997, 1
        %v1358 = vperm.slane %v997, 2
        %v1359 = vperm.slane %v997, 3
        %v1360 = vperm.slane %v997, 4
        %v1361 = vperm.slane %v997, 5
        %v1362 = vperm.slane %v997, 6
        %v1363 = vperm.slane %v997, 7
        %v1364 = vperm.slane %v998, 0
        %v1365 = vperm.slane %v998, 1
        %v1366 = vperm.slane %v998, 2
        %v1367 = vperm.slane %v998, 3
        %v1368 = vperm.slane %v998, 4
        %v1369 = vperm.slane %v998, 5
        %v1370 = vperm.slane %v998, 6
        %v1371 = vperm.slane %v998, 7
        %v1372 = vperm.slane %v999, 0
        %v1373 = vperm.slane %v999, 1
        %v1374 = vperm.slane %v999, 2
        %v1375 = vperm.slane %v999, 3
        %v1376 = vperm.slane %v999, 4
        %v1377 = vperm.slane %v999, 5
        %v1378 = vperm.slane %v999, 6
        %v1379 = vperm.slane %v999, 7
        %v1380 = vperm.slane %v1000, 0
        %v1381 = vperm.slane %v1000, 1
        %v1382 = vperm.slane %v1000, 2
        %v1383 = vperm.slane %v1000, 3
        %v1384 = vperm.slane %v1000, 4
        %v1385 = vperm.slane %v1000, 5
        %v1386 = vperm.slane %v1000, 6
        %v1387 = vperm.slane %v1000, 7
        %v1388 = vperm.slane %v1001, 0
        %v1389 = vperm.slane %v1001, 1
        %v1390 = vperm.slane %v1001, 2
        %v1391 = vperm.slane %v1001, 3
        %v1392 = vperm.slane %v1001, 4
        %v1393 = vperm.slane %v1001, 5
        %v1394 = vperm.slane %v1001, 6
        %v1395 = vperm.slane %v1001, 7
        %v1396 = vperm.slane %v1002, 0
        %v1397 = vperm.slane %v1002, 1
        %v1398 = vperm.slane %v1002, 2
        %v1399 = vperm.slane %v1002, 3
        %v1400 = vperm.slane %v1002, 4
        %v1401 = vperm.slane %v1002, 5
        %v1402 = vperm.slane %v1002, 6
        %v1403 = vperm.slane %v1002, 7
        %v1404 = vperm.slane %v1003, 0
        %v1405 = vperm.slane %v1003, 1
        %v1406 = vperm.slane %v1003, 2
        %v1407 = vperm.slane %v1003, 3
        %v1408 = vperm.slane %v1003, 4
        %v1409 = vperm.slane %v1003, 5
        %v1410 = vperm.slane %v1003, 6
        %v1411 = vperm.slane %v1003, 7
        %v1412 = vperm.slane %v1004, 0
        %v1413 = vperm.slane %v1004, 1
        %v1414 = vperm.slane %v1004, 2
        %v1415 = vperm.slane %v1004, 3
        %v1416 = vperm.slane %v1004, 4
        %v1417 = vperm.slane %v1004, 5
        %v1418 = vperm.slane %v1004, 6
        %v1419 = vperm.slane %v1004, 7
        %v1420 = vperm.slane %v1005, 0
        %v1421 = vperm.slane %v1005, 1
        %v1422 = vperm.slane %v1005, 2
        %v1423 = vperm.slane %v1005, 3
        %v1424 = vperm.slane %v1005, 4
        %v1425 = vperm.slane %v1005, 5
        %v1426 = vperm.slane %v1005, 6
        %v1427 = vperm.slane %v1005, 7
        %v1428 = vperm.slane %v1006, 0
        %v1429 = vperm.slane %v1006, 1
        %v1430 = vperm.slane %v1006, 2
        %v1431 = vperm.slane %v1006, 3
        %v1432 = vperm.slane %v1006, 4
        %v1433 = vperm.slane %v1006, 5
        %v1434 = vperm.slane %v1006, 6
        %v1435 = vperm.slane %v1006, 7
        %v1436 = vperm.slane %v1007, 0
        %v1437 = vperm.slane %v1007, 1
        %v1438 = vperm.slane %v1007, 2
        %v1439 = vperm.slane %v1007, 3
        %v1440 = vperm.slane %v1007, 4
        %v1441 = vperm.slane %v1007, 5
        %v1442 = vperm.slane %v1007, 6
        %v1443 = vperm.slane %v1007, 7
        %v1444 = vperm.slane %v1008, 0
        %v1445 = vperm.slane %v1008, 1
        %v1446 = vperm.slane %v1008, 2
        %v1447 = vperm.slane %v1008, 3
        %v1448 = vperm.slane %v1008, 4
        %v1449 = vperm.slane %v1008, 5
        %v1450 = vperm.slane %v1008, 6
        %v1451 = vperm.slane %v1008, 7
        %v1452 = vperm.slane %v1009, 0
        %v1453 = vperm.slane %v1009, 1
        %v1454 = vperm.slane %v1009, 2
        %v1455 = vperm.slane %v1009, 3
        %v1456 = vperm.slane %v1009, 4
        %v1457 = vperm.slane %v1009, 5
        %v1458 = vperm.slane %v1009, 6
        %v1459 = vperm.slane %v1009, 7
        %v1460 = vperm.slane %v1010, 0
        %v1461 = vperm.slane %v1010, 1
        %v1462 = vperm.slane %v1010, 2
        %v1463 = vperm.slane %v1010, 3
        %v1464 = vperm.slane %v1010, 4
        %v1465 = vperm.slane %v1010, 5
        %v1466 = vperm.slane %v1010, 6
        %v1467 = vperm.slane %v1010, 7
        %v1468 = vperm.slane %v1011, 0
        %v1469 = vperm.slane %v1011, 1
        %v1470 = vperm.slane %v1011, 2
        %v1471 = vperm.slane %v1011, 3
        %v1472 = vperm.slane %v1011, 4
        %v1473 = vperm.slane %v1011, 5
        %v1474 = vperm.slane %v1011, 6
        %v1475 = vperm.slane %v1011, 7
        %v1476 = vperm.slane %v1012, 0
        %v1477 = vperm.slane %v1012, 1
        %v1478 = vperm.slane %v1012, 2
        %v1479 = vperm.slane %v1012, 3
        %v1480 = vperm.slane %v1012, 4
        %v1481 = vperm.slane %v1012, 5
        %v1482 = vperm.slane %v1012, 6
        %v1483 = vperm.slane %v1012, 7
        %v1484 = vperm.slane %v1013, 0
        %v1485 = vperm.slane %v1013, 1
        %v1486 = vperm.slane %v1013, 2
        %v1487 = vperm.slane %v1013, 3
        %v1488 = vperm.slane %v1013, 4
        %v1489 = vperm.slane %v1013, 5
        %v1490 = vperm.slane %v1013, 6
        %v1491 = vperm.slane %v1013, 7
        %v1492 = vperm.slane %v1014, 0
        %v1493 = vperm.slane %v1014, 1
        %v1494 = vperm.slane %v1014, 2
        %v1495 = vperm.slane %v1014, 3
        %v1496 = vperm.slane %v1014, 4
        %v1497 = vperm.slane %v1014, 5
        %v1498 = vperm.slane %v1014, 6
        %v1499 = vperm.slane %v1014, 7
        %v1500 = vperm.slane %v1015, 0
        %v1501 = vperm.slane %v1015, 1
        %v1502 = vperm.slane %v1015, 2
        %v1503 = vperm.slane %v1015, 3
        %v1504 = vperm.slane %v1015, 4
        %v1505 = vperm.slane %v1015, 5
        %v1506 = vperm.slane %v1015, 6
        %v1507 = vperm.slane %v1015, 7
        %v1508 = vperm.slane %v1016, 0
        %v1509 = vperm.slane %v1016, 1
        %v1510 = vperm.slane %v1016, 2
        %v1511 = vperm.slane %v1016, 3
        %v1512 = vperm.slane %v1016, 4
        %v1513 = vperm.slane %v1016, 5
        %v1514 = vperm.slane %v1016, 6
        %v1515 = vperm.slane %v1016, 7
        %v1516 = vperm.slane %v1017, 0
        %v1517 = vperm.slane %v1017, 1
        %v1518 = vperm.slane %v1017, 2
        %v1519 = vperm.slane %v1017, 3
        %v1520 = vperm.slane %v1017, 4
        %v1521 = vperm.slane %v1017, 5
        %v1522 = vperm.slane %v1017, 6
        %v1523 = vperm.slane %v1017, 7
        %v1524 = vperm.slane %v1018, 0
        %v1525 = vperm.slane %v1018, 1
        %v1526 = vperm.slane %v1018, 2
        %v1527 = vperm.slane %v1018, 3
        %v1528 = vperm.slane %v1018, 4
        %v1529 = vperm.slane %v1018, 5
        %v1530 = vperm.slane %v1018, 6
        %v1531 = vperm.slane %v1018, 7
        %v1532 = vperm.slane %v1019, 0
        %v1533 = vperm.slane %v1019, 1
        %v1534 = vperm.slane %v1019, 2
        %v1535 = vperm.slane %v1019, 3
        %v1536 = vperm.slane %v1019, 4
        %v1537 = vperm.slane %v1019, 5
        %v1538 = vperm.slane %v1019, 6
        %v1539 = vperm.slane %v1019, 7
        %v1540 = vperm.slane %v1020, 0
        %v1541 = vperm.slane %v1020, 1
        %v1542 = vperm.slane %v1020, 2
        %v1543 = vperm.slane %v1020, 3
        %v1544 = vperm.slane %v1020, 4
        %v1545 = vperm.slane %v1020, 5
        %v1546 = vperm.slane %v1020, 6
        %v1547 = vperm.slane %v1020, 7
        %v1548 = vperm.slane %v1021, 0
        %v1549 = vperm.slane %v1021, 1
        %v1550 = vperm.slane %v1021, 2
        %v1551 = vperm.slane %v1021, 3
        %v1552 = vperm.slane %v1021, 4
        %v1553 = vperm.slane %v1021, 5
        %v1554 = vperm.slane %v1021, 6
        %v1555 = vperm.slane %v1021, 7
        %v1556 = vperm.slane %v1022, 0
        %v1557 = vperm.slane %v1022, 1
        %v1558 = vperm.slane %v1022, 2
        %v1559 = vperm.slane %v1022, 3
        %v1560 = vperm.slane %v1022, 4
        %v1561 = vperm.slane %v1022, 5
        %v1562 = vperm.slane %v1022, 6
        %v1563 = vperm.slane %v1022, 7
        %v1564 = vperm.slane %v1023, 0
        %v1565 = vperm.slane %v1023, 1
        %v1566 = vperm.slane %v1023, 2
        %v1567 = vperm.slane %v1023, 3
        %v1568 = vperm.slane %v1023, 4
        %v1569 = vperm.slane %v1023, 5
        %v1570 = vperm.slane %v1023, 6
        %v1571 = vperm.slane %v1023, 7
        %v1572 = vperm.slane %v1024, 0
        %v1573 = vperm.slane %v1024, 1
        %v1574 = vperm.slane %v1024, 2
        %v1575 = vperm.slane %v1024, 3
        %v1576 = vperm.slane %v1024, 4
        %v1577 = vperm.slane %v1024, 5
        %v1578 = vperm.slane %v1024, 6
        %v1579 = vperm.slane %v1024, 7
        %v1580 = vperm.slane %v1025, 0
        %v1581 = vperm.slane %v1025, 1
        %v1582 = vperm.slane %v1025, 2
        %v1583 = vperm.slane %v1025, 3
        %v1584 = vperm.slane %v1025, 4
        %v1585 = vperm.slane %v1025, 5
        %v1586 = vperm.slane %v1025, 6
        %v1587 = vperm.slane %v1025, 7
        %v1588 = vperm.slane %v1026, 0
        %v1589 = vperm.slane %v1026, 1
        %v1590 = vperm.slane %v1026, 2
        %v1591 = vperm.slane %v1026, 3
        %v1592 = vperm.slane %v1026, 4
        %v1593 = vperm.slane %v1026, 5
        %v1594 = vperm.slane %v1026, 6
        %v1595 = vperm.slane %v1026, 7
        %v1596 = vperm.slane %v1027, 0
        %v1597 = vperm.slane %v1027, 1
        %v1598 = vperm.slane %v1027, 2
        %v1599 = vperm.slane %v1027, 3
        %v1600 = vperm.slane %v1027, 4
        %v1601 = vperm.slane %v1027, 5
        %v1602 = vperm.slane %v1027, 6
        %v1603 = vperm.slane %v1027, 7
        %1604 = vst [vmem:[#allocation1] ss:$9 sm:$0xff] %v1092
        %s1605 = scalar_lea.vmem [#allocation1], 1
        %1606 = vst [vmem:[%s1605] ss:$9 sm:$0xff] %v1093
        %s1607 = scalar_lea.vmem [#allocation1], 2
        %1608 = vst [vmem:[%s1607] ss:$9 sm:$0xff] %v1094
        %s1609 = scalar_lea.vmem [#allocation1], 3
        %1610 = vst [vmem:[%s1609] ss:$9 sm:$0xff] %v1095
        %s1611 = scalar_lea.vmem [#allocation1], 4
        %1612 = vst [vmem:[%s1611] ss:$9 sm:$0xff] %v1096
        %s1613 = scalar_lea.vmem [#allocation1], 5
        %1614 = vst [vmem:[%s1613] ss:$9 sm:$0xff] %v1097
        %s1615 = scalar_lea.vmem [#allocation1], 6
        %1616 = vst [vmem:[%s1615] ss:$9 sm:$0xff] %v1098
        %s1617 = scalar_lea.vmem [#allocation1], 7
        %1618 = vst [vmem:[%s1617] ss:$9 sm:$0xff] %v1099
        %v1619 = vld [vmem:[#allocation1] sm:$0xff]
        %1620 = vst [vmem:[#allocation1] ss:$9 sm:$0xff] %v1100
        %1621 = vst [vmem:[%s1605] ss:$9 sm:$0xff] %v1101
        %1622 = vst [vmem:[%s1607] ss:$9 sm:$0xff] %v1102
        %1623 = vst [vmem:[%s1609] ss:$9 sm:$0xff] %v1103
        %1624 = vst [vmem:[%s1611] ss:$9 sm:$0xff] %v1104
        %1625 = vst [vmem:[%s1613] ss:$9 sm:$0xff] %v1105
        %1626 = vst [vmem:[%s1615] ss:$9 sm:$0xff] %v1106
        %1627 = vst [vmem:[%s1617] ss:$9 sm:$0xff] %v1107
        %v1628 = vld [vmem:[#allocation1] sm:$0xff]
        %1629 = vst [vmem:[#allocation1] ss:$9 sm:$0xff] %v1108
        %1630 = vst [vmem:[%s1605] ss:$9 sm:$0xff] %v1109
        %1631 = vst [vmem:[%s1607] ss:$9 sm:$0xff] %v1110
        %1632 = vst [vmem:[%s1609] ss:$9 sm:$0xff] %v1111
        %1633 = vst [vmem:[%s1611] ss:$9 sm:$0xff] %v1112
        %1634 = vst [vmem:[%s1613] ss:$9 sm:$0xff] %v1113
        %1635 = vst [vmem:[%s1615] ss:$9 sm:$0xff] %v1114
        %1636 = vst [vmem:[%s1617] ss:$9 sm:$0xff] %v1115
        %v1637 = vld [vmem:[#allocation1] sm:$0xff]
        %1638 = vst [vmem:[#allocation1] ss:$9 sm:$0xff] %v1116
        %1639 = vst [vmem:[%s1605] ss:$9 sm:$0xff] %v1117
        %1640 = vst [vmem:[%s1607] ss:$9 sm:$0xff] %v1118
        %1641 = vst [vmem:[%s1609] ss:$9 sm:$0xff] %v1119
        %1642 = vst [vmem:[%s1611] ss:$9 sm:$0xff] %v1120
        %1643 = vst [vmem:[%s1613] ss:$9 sm:$0xff] %v1121
        %1644 = vst [vmem:[%s1615] ss:$9 sm:$0xff] %v1122
        %1645 = vst [vmem:[%s1617] ss:$9 sm:$0xff] %v1123
        %v1646 = vld [vmem:[#allocation1] sm:$0xff]
        %1647 = vst [vmem:[#allocation1] ss:$9 sm:$0xff] %v1124
        %1648 = vst [vmem:[%s1605] ss:$9 sm:$0xff] %v1125
        %1649 = vst [vmem:[%s1607] ss:$9 sm:$0xff] %v1126
        %1650 = vst [vmem:[%s1609] ss:$9 sm:$0xff] %v1127
        %1651 = vst [vmem:[%s1611] ss:$9 sm:$0xff] %v1128
        %1652 = vst [vmem:[%s1613] ss:$9 sm:$0xff] %v1129
        %1653 = vst [vmem:[%s1615] ss:$9 sm:$0xff] %v1130
        %1654 = vst [vmem:[%s1617] ss:$9 sm:$0xff] %v1131
        %v1655 = vld [vmem:[#allocation1] sm:$0xff]
        %1656 = vst [vmem:[#allocation1] ss:$9 sm:$0xff] %v1132
        %1657 = vst [vmem:[%s1605] ss:$9 sm:$0xff] %v1133
        %1658 = vst [vmem:[%s1607] ss:$9 sm:$0xff] %v1134
        %1659 = vst [vmem:[%s1609] ss:$9 sm:$0xff] %v1135
        %1660 = vst [vmem:[%s1611] ss:$9 sm:$0xff] %v1136
        %1661 = vst [vmem:[%s1613] ss:$9 sm:$0xff] %v1137
        %1662 = vst [vmem:[%s1615] ss:$9 sm:$0xff] %v1138
        %1663 = vst [vmem:[%s1617] ss:$9 sm:$0xff] %v1139
        %v1664 = vld [vmem:[#allocation1] sm:$0xff]
        %1665 = vst [vmem:[#allocation1] ss:$9 sm:$0xff] %v1140
        %1666 = vst [vmem:[%s1605] ss:$9 sm:$0xff] %v1141
        %1667 = vst [vmem:[%s1607] ss:$9 sm:$0xff] %v1142
        %1668 = vst [vmem:[%s1609] ss:$9 sm:$0xff] %v1143
        %1669 = vst [vmem:[%s1611] ss:$9 sm:$0xff] %v1144
        %1670 = vst [vmem:[%s1613] ss:$9 sm:$0xff] %v1145
        %1671 = vst [vmem:[%s1615] ss:$9 sm:$0xff] %v1146
        %1672 = vst [vmem:[%s1617] ss:$9 sm:$0xff] %v1147
        %v1673 = vld [vmem:[#allocation1] sm:$0xff]
        %1674 = vst [vmem:[#allocation1] ss:$9 sm:$0xff] %v1148
        %1675 = vst [vmem:[%s1605] ss:$9 sm:$0xff] %v1149
        %1676 = vst [vmem:[%s1607] ss:$9 sm:$0xff] %v1150
        %1677 = vst [vmem:[%s1609] ss:$9 sm:$0xff] %v1151
        %1678 = vst [vmem:[%s1611] ss:$9 sm:$0xff] %v1152
        %1679 = vst [vmem:[%s1613] ss:$9 sm:$0xff] %v1153
        %1680 = vst [vmem:[%s1615] ss:$9 sm:$0xff] %v1154
        %1681 = vst [vmem:[%s1617] ss:$9 sm:$0xff] %v1155
        %v1682 = vld [vmem:[#allocation1] sm:$0xff]
        %1683 = vst [vmem:[#allocation1] ss:$9 sm:$0xff] %v1156
        %1684 = vst [vmem:[%s1605] ss:$9 sm:$0xff] %v1157
        %1685 = vst [vmem:[%s1607] ss:$9 sm:$0xff] %v1158
        %1686 = vst [vmem:[%s1609] ss:$9 sm:$0xff] %v1159
        %1687 = vst [vmem:[%s1611] ss:$9 sm:$0xff] %v1160
        %1688 = vst [vmem:[%s1613] ss:$9 sm:$0xff] %v1161
        %1689 = vst [vmem:[%s1615] ss:$9 sm:$0xff] %v1162
        %1690 = vst [vmem:[%s1617] ss:$9 sm:$0xff] %v1163
        %v1691 = vld [vmem:[#allocation1] sm:$0xff]
        %1692 = vst [vmem:[#allocation1] ss:$9 sm:$0xff] %v1164
        %1693 = vst [vmem:[%s1605] ss:$9 sm:$0xff] %v1165
        %1694 = vst [vmem:[%s1607] ss:$9 sm:$0xff] %v1166
        %1695 = vst [vmem:[%s1609] ss:$9 sm:$0xff] %v1167
        %1696 = vst [vmem:[%s1611] ss:$9 sm:$0xff] %v1168
        %1697 = vst [vmem:[%s1613] ss:$9 sm:$0xff] %v1169
        %1698 = vst [vmem:[%s1615] ss:$9 sm:$0xff] %v1170
        %1699 = vst [vmem:[%s1617] ss:$9 sm:$0xff] %v1171
        %v1700 = vld [vmem:[#allocation1] sm:$0xff]
        %1701 = vst [vmem:[#allocation1] ss:$9 sm:$0xff] %v1172
        %1702 = vst [vmem:[%s1605] ss:$9 sm:$0xff] %v1173
        %1703 = vst [vmem:[%s1607] ss:$9 sm:$0xff] %v1174
        %1704 = vst [vmem:[%s1609] ss:$9 sm:$0xff] %v1175
        %1705 = vst [vmem:[%s1611] ss:$9 sm:$0xff] %v1176
        %1706 = vst [vmem:[%s1613] ss:$9 sm:$0xff] %v1177
        %1707 = vst [vmem:[%s1615] ss:$9 sm:$0xff] %v1178
        %1708 = vst [vmem:[%s1617] ss:$9 sm:$0xff] %v1179
        %v1709 = vld [vmem:[#allocation1] sm:$0xff]
        %1710 = vst [vmem:[#allocation1] ss:$9 sm:$0xff] %v1180
        %1711 = vst [vmem:[%s1605] ss:$9 sm:$0xff] %v1181
        %1712 = vst [vmem:[%s1607] ss:$9 sm:$0xff] %v1182
        %1713 = vst [vmem:[%s1609] ss:$9 sm:$0xff] %v1183
        %1714 = vst [vmem:[%s1611] ss:$9 sm:$0xff] %v1184
        %1715 = vst [vmem:[%s1613] ss:$9 sm:$0xff] %v1185
        %1716 = vst [vmem:[%s1615] ss:$9 sm:$0xff] %v1186
        %1717 = vst [vmem:[%s1617] ss:$9 sm:$0xff] %v1187
        %v1718 = vld [vmem:[#allocation1] sm:$0xff]
        %1719 = vst [vmem:[#allocation1] ss:$9 sm:$0xff] %v1188
        %1720 = vst [vmem:[%s1605] ss:$9 sm:$0xff] %v1189
        %1721 = vst [vmem:[%s1607] ss:$9 sm:$0xff] %v1190
        %1722 = vst [vmem:[%s1609] ss:$9 sm:$0xff] %v1191
        %1723 = vst [vmem:[%s1611] ss:$9 sm:$0xff] %v1192
        %1724 = vst [vmem:[%s1613] ss:$9 sm:$0xff] %v1193
        %1725 = vst [vmem:[%s1615] ss:$9 sm:$0xff] %v1194
        %1726 = vst [vmem:[%s1617] ss:$9 sm:$0xff] %v1195
        %v1727 = vld [vmem:[#allocation1] sm:$0xff]
        %1728 = vst [vmem:[#allocation1] ss:$9 sm:$0xff] %v1196
        %1729 = vst [vmem:[%s1605] ss:$9 sm:$0xff] %v1197
        %1730 = vst [vmem:[%s1607] ss:$9 sm:$0xff] %v1198
        %1731 = vst [vmem:[%s1609] ss:$9 sm:$0xff] %v1199
        %1732 = vst [vmem:[%s1611] ss:$9 sm:$0xff] %v1200
        %1733 = vst [vmem:[%s1613] ss:$9 sm:$0xff] %v1201
        %1734 = vst [vmem:[%s1615] ss:$9 sm:$0xff] %v1202
        %1735 = vst [vmem:[%s1617] ss:$9 sm:$0xff] %v1203
        %v1736 = vld [vmem:[#allocation1] sm:$0xff]
        %1737 = vst [vmem:[#allocation1] ss:$9 sm:$0xff] %v1204
        %1738 = vst [vmem:[%s1605] ss:$9 sm:$0xff] %v1205
        %1739 = vst [vmem:[%s1607] ss:$9 sm:$0xff] %v1206
        %1740 = vst [vmem:[%s1609] ss:$9 sm:$0xff] %v1207
        %1741 = vst [vmem:[%s1611] ss:$9 sm:$0xff] %v1208
        %1742 = vst [vmem:[%s1613] ss:$9 sm:$0xff] %v1209
        %1743 = vst [vmem:[%s1615] ss:$9 sm:$0xff] %v1210
        %1744 = vst [vmem:[%s1617] ss:$9 sm:$0xff] %v1211
        %v1745 = vld [vmem:[#allocation1] sm:$0xff]
        %1746 = vst [vmem:[#allocation1] ss:$9 sm:$0xff] %v1212
        %1747 = vst [vmem:[%s1605] ss:$9 sm:$0xff] %v1213
        %1748 = vst [vmem:[%s1607] ss:$9 sm:$0xff] %v1214
        %1749 = vst [vmem:[%s1609] ss:$9 sm:$0xff] %v1215
        %1750 = vst [vmem:[%s1611] ss:$9 sm:$0xff] %v1216
        %1751 = vst [vmem:[%s1613] ss:$9 sm:$0xff] %v1217
        %1752 = vst [vmem:[%s1615] ss:$9 sm:$0xff] %v1218
        %1753 = vst [vmem:[%s1617] ss:$9 sm:$0xff] %v1219
        %v1754 = vld [vmem:[#allocation1] sm:$0xff]
        %1755 = vst [vmem:[#allocation1] ss:$9 sm:$0xff] %v1220
        %1756 = vst [vmem:[%s1605] ss:$9 sm:$0xff] %v1221
        %1757 = vst [vmem:[%s1607] ss:$9 sm:$0xff] %v1222
        %1758 = vst [vmem:[%s1609] ss:$9 sm:$0xff] %v1223
        %1759 = vst [vmem:[%s1611] ss:$9 sm:$0xff] %v1224
        %1760 = vst [vmem:[%s1613] ss:$9 sm:$0xff] %v1225
        %1761 = vst [vmem:[%s1615] ss:$9 sm:$0xff] %v1226
        %1762 = vst [vmem:[%s1617] ss:$9 sm:$0xff] %v1227
        %v1763 = vld [vmem:[#allocation1] sm:$0xff]
        %1764 = vst [vmem:[#allocation1] ss:$9 sm:$0xff] %v1228
        %1765 = vst [vmem:[%s1605] ss:$9 sm:$0xff] %v1229
        %1766 = vst [vmem:[%s1607] ss:$9 sm:$0xff] %v1230
        %1767 = vst [vmem:[%s1609] ss:$9 sm:$0xff] %v1231
        %1768 = vst [vmem:[%s1611] ss:$9 sm:$0xff] %v1232
        %1769 = vst [vmem:[%s1613] ss:$9 sm:$0xff] %v1233
        %1770 = vst [vmem:[%s1615] ss:$9 sm:$0xff] %v1234
        %1771 = vst [vmem:[%s1617] ss:$9 sm:$0xff] %v1235
        %v1772 = vld [vmem:[#allocation1] sm:$0xff]
        %1773 = vst [vmem:[#allocation1] ss:$9 sm:$0xff] %v1236
        %1774 = vst [vmem:[%s1605] ss:$9 sm:$0xff] %v1237
        %1775 = vst [vmem:[%s1607] ss:$9 sm:$0xff] %v1238
        %1776 = vst [vmem:[%s1609] ss:$9 sm:$0xff] %v1239
        %1777 = vst [vmem:[%s1611] ss:$9 sm:$0xff] %v1240
        %1778 = vst [vmem:[%s1613] ss:$9 sm:$0xff] %v1241
        %1779 = vst [vmem:[%s1615] ss:$9 sm:$0xff] %v1242
        %1780 = vst [vmem:[%s1617] ss:$9 sm:$0xff] %v1243
        %v1781 = vld [vmem:[#allocation1] sm:$0xff]
        %1782 = vst [vmem:[#allocation1] ss:$9 sm:$0xff] %v1244
        %1783 = vst [vmem:[%s1605] ss:$9 sm:$0xff] %v1245
        %1784 = vst [vmem:[%s1607] ss:$9 sm:$0xff] %v1246
        %1785 = vst [vmem:[%s1609] ss:$9 sm:$0xff] %v1247
        %1786 = vst [vmem:[%s1611] ss:$9 sm:$0xff] %v1248
        %1787 = vst [vmem:[%s1613] ss:$9 sm:$0xff] %v1249
        %1788 = vst [vmem:[%s1615] ss:$9 sm:$0xff] %v1250
        %1789 = vst [vmem:[%s1617] ss:$9 sm:$0xff] %v1251
        %v1790 = vld [vmem:[#allocation1] sm:$0xff]
        %1791 = vst [vmem:[#allocation1] ss:$9 sm:$0xff] %v1252
        %1792 = vst [vmem:[%s1605] ss:$9 sm:$0xff] %v1253
        %1793 = vst [vmem:[%s1607] ss:$9 sm:$0xff] %v1254
        %1794 = vst [vmem:[%s1609] ss:$9 sm:$0xff] %v1255
        %1795 = vst [vmem:[%s1611] ss:$9 sm:$0xff] %v1256
        %1796 = vst [vmem:[%s1613] ss:$9 sm:$0xff] %v1257
        %1797 = vst [vmem:[%s1615] ss:$9 sm:$0xff] %v1258
        %1798 = vst [vmem:[%s1617] ss:$9 sm:$0xff] %v1259
        %v1799 = vld [vmem:[#allocation1] sm:$0xff]
        %1800 = vst [vmem:[#allocation1] ss:$9 sm:$0xff] %v1260
        %1801 = vst [vmem:[%s1605] ss:$9 sm:$0xff] %v1261
        %1802 = vst [vmem:[%s1607] ss:$9 sm:$0xff] %v1262
        %1803 = vst [vmem:[%s1609] ss:$9 sm:$0xff] %v1263
        %1804 = vst [vmem:[%s1611] ss:$9 sm:$0xff] %v1264
        %1805 = vst [vmem:[%s1613] ss:$9 sm:$0xff] %v1265
        %1806 = vst [vmem:[%s1615] ss:$9 sm:$0xff] %v1266
        %1807 = vst [vmem:[%s1617] ss:$9 sm:$0xff] %v1267
        %v1808 = vld [vmem:[#allocation1] sm:$0xff]
        %1809 = vst [vmem:[#allocation1] ss:$9 sm:$0xff] %v1268
        %1810 = vst [vmem:[%s1605] ss:$9 sm:$0xff] %v1269
        %1811 = vst [vmem:[%s1607] ss:$9 sm:$0xff] %v1270
        %1812 = vst [vmem:[%s1609] ss:$9 sm:$0xff] %v1271
        %1813 = vst [vmem:[%s1611] ss:$9 sm:$0xff] %v1272
        %1814 = vst [vmem:[%s1613] ss:$9 sm:$0xff] %v1273
        %1815 = vst [vmem:[%s1615] ss:$9 sm:$0xff] %v1274
        %1816 = vst [vmem:[%s1617] ss:$9 sm:$0xff] %v1275
        %v1817 = vld [vmem:[#allocation1] sm:$0xff]
        %1818 = vst [vmem:[#allocation1] ss:$9 sm:$0xff] %v1276
        %1819 = vst [vmem:[%s1605] ss:$9 sm:$0xff] %v1277
        %1820 = vst [vmem:[%s1607] ss:$9 sm:$0xff] %v1278
        %1821 = vst [vmem:[%s1609] ss:$9 sm:$0xff] %v1279
        %1822 = vst [vmem:[%s1611] ss:$9 sm:$0xff] %v1280
        %1823 = vst [vmem:[%s1613] ss:$9 sm:$0xff] %v1281
        %1824 = vst [vmem:[%s1615] ss:$9 sm:$0xff] %v1282
        %1825 = vst [vmem:[%s1617] ss:$9 sm:$0xff] %v1283
        %v1826 = vld [vmem:[#allocation1] sm:$0xff]
        %1827 = vst [vmem:[#allocation1] ss:$9 sm:$0xff] %v1284
        %1828 = vst [vmem:[%s1605] ss:$9 sm:$0xff] %v1285
        %1829 = vst [vmem:[%s1607] ss:$9 sm:$0xff] %v1286
        %1830 = vst [vmem:[%s1609] ss:$9 sm:$0xff] %v1287
        %1831 = vst [vmem:[%s1611] ss:$9 sm:$0xff] %v1288
        %1832 = vst [vmem:[%s1613] ss:$9 sm:$0xff] %v1289
        %1833 = vst [vmem:[%s1615] ss:$9 sm:$0xff] %v1290
        %1834 = vst [vmem:[%s1617] ss:$9 sm:$0xff] %v1291
        %v1835 = vld [vmem:[#allocation1] sm:$0xff]
        %1836 = vst [vmem:[#allocation1] ss:$9 sm:$0xff] %v1292
        %1837 = vst [vmem:[%s1605] ss:$9 sm:$0xff] %v1293
        %1838 = vst [vmem:[%s1607] ss:$9 sm:$0xff] %v1294
        %1839 = vst [vmem:[%s1609] ss:$9 sm:$0xff] %v1295
        %1840 = vst [vmem:[%s1611] ss:$9 sm:$0xff] %v1296
        %1841 = vst [vmem:[%s1613] ss:$9 sm:$0xff] %v1297
        %1842 = vst [vmem:[%s1615] ss:$9 sm:$0xff] %v1298
        %1843 = vst [vmem:[%s1617] ss:$9 sm:$0xff] %v1299
        %v1844 = vld [vmem:[#allocation1] sm:$0xff]
        %1845 = vst [vmem:[#allocation1] ss:$9 sm:$0xff] %v1300
        %1846 = vst [vmem:[%s1605] ss:$9 sm:$0xff] %v1301
        %1847 = vst [vmem:[%s1607] ss:$9 sm:$0xff] %v1302
        %1848 = vst [vmem:[%s1609] ss:$9 sm:$0xff] %v1303
        %1849 = vst [vmem:[%s1611] ss:$9 sm:$0xff] %v1304
        %1850 = vst [vmem:[%s1613] ss:$9 sm:$0xff] %v1305
        %1851 = vst [vmem:[%s1615] ss:$9 sm:$0xff] %v1306
        %1852 = vst [vmem:[%s1617] ss:$9 sm:$0xff] %v1307
        %v1853 = vld [vmem:[#allocation1] sm:$0xff]
        %1854 = vst [vmem:[#allocation1] ss:$9 sm:$0xff] %v1308
        %1855 = vst [vmem:[%s1605] ss:$9 sm:$0xff] %v1309
        %1856 = vst [vmem:[%s1607] ss:$9 sm:$0xff] %v1310
        %1857 = vst [vmem:[%s1609] ss:$9 sm:$0xff] %v1311
        %1858 = vst [vmem:[%s1611] ss:$9 sm:$0xff] %v1312
        %1859 = vst [vmem:[%s1613] ss:$9 sm:$0xff] %v1313
        %1860 = vst [vmem:[%s1615] ss:$9 sm:$0xff] %v1314
        %1861 = vst [vmem:[%s1617] ss:$9 sm:$0xff] %v1315
        %v1862 = vld [vmem:[#allocation1] sm:$0xff]
        %1863 = vst [vmem:[#allocation1] ss:$9 sm:$0xff] %v1316
        %1864 = vst [vmem:[%s1605] ss:$9 sm:$0xff] %v1317
        %1865 = vst [vmem:[%s1607] ss:$9 sm:$0xff] %v1318
        %1866 = vst [vmem:[%s1609] ss:$9 sm:$0xff] %v1319
        %1867 = vst [vmem:[%s1611] ss:$9 sm:$0xff] %v1320
        %1868 = vst [vmem:[%s1613] ss:$9 sm:$0xff] %v1321
        %1869 = vst [vmem:[%s1615] ss:$9 sm:$0xff] %v1322
        %1870 = vst [vmem:[%s1617] ss:$9 sm:$0xff] %v1323
        %v1871 = vld [vmem:[#allocation1] sm:$0xff]
        %1872 = vst [vmem:[#allocation1] ss:$9 sm:$0xff] %v1324
        %1873 = vst [vmem:[%s1605] ss:$9 sm:$0xff] %v1325
        %1874 = vst [vmem:[%s1607] ss:$9 sm:$0xff] %v1326
        %1875 = vst [vmem:[%s1609] ss:$9 sm:$0xff] %v1327
        %1876 = vst [vmem:[%s1611] ss:$9 sm:$0xff] %v1328
        %1877 = vst [vmem:[%s1613] ss:$9 sm:$0xff] %v1329
        %1878 = vst [vmem:[%s1615] ss:$9 sm:$0xff] %v1330
        %1879 = vst [vmem:[%s1617] ss:$9 sm:$0xff] %v1331
        %v1880 = vld [vmem:[#allocation1] sm:$0xff]
        %1881 = vst [vmem:[#allocation1] ss:$9 sm:$0xff] %v1332
        %1882 = vst [vmem:[%s1605] ss:$9 sm:$0xff] %v1333
        %1883 = vst [vmem:[%s1607] ss:$9 sm:$0xff] %v1334
        %1884 = vst [vmem:[%s1609] ss:$9 sm:$0xff] %v1335
        %1885 = vst [vmem:[%s1611] ss:$9 sm:$0xff] %v1336
        %1886 = vst [vmem:[%s1613] ss:$9 sm:$0xff] %v1337
        %1887 = vst [vmem:[%s1615] ss:$9 sm:$0xff] %v1338
        %1888 = vst [vmem:[%s1617] ss:$9 sm:$0xff] %v1339
        %v1889 = vld [vmem:[#allocation1] sm:$0xff]
        %1890 = vst [vmem:[#allocation1] ss:$9 sm:$0xff] %v1340
        %1891 = vst [vmem:[%s1605] ss:$9 sm:$0xff] %v1341
        %1892 = vst [vmem:[%s1607] ss:$9 sm:$0xff] %v1342
        %1893 = vst [vmem:[%s1609] ss:$9 sm:$0xff] %v1343
        %1894 = vst [vmem:[%s1611] ss:$9 sm:$0xff] %v1344
        %1895 = vst [vmem:[%s1613] ss:$9 sm:$0xff] %v1345
        %1896 = vst [vmem:[%s1615] ss:$9 sm:$0xff] %v1346
        %1897 = vst [vmem:[%s1617] ss:$9 sm:$0xff] %v1347
        %v1898 = vld [vmem:[#allocation1] sm:$0xff]
        %1899 = vst [vmem:[#allocation1] ss:$9 sm:$0xff] %v1348
        %1900 = vst [vmem:[%s1605] ss:$9 sm:$0xff] %v1349
        %1901 = vst [vmem:[%s1607] ss:$9 sm:$0xff] %v1350
        %1902 = vst [vmem:[%s1609] ss:$9 sm:$0xff] %v1351
        %1903 = vst [vmem:[%s1611] ss:$9 sm:$0xff] %v1352
        %1904 = vst [vmem:[%s1613] ss:$9 sm:$0xff] %v1353
        %1905 = vst [vmem:[%s1615] ss:$9 sm:$0xff] %v1354
        %1906 = vst [vmem:[%s1617] ss:$9 sm:$0xff] %v1355
        %v1907 = vld [vmem:[#allocation1] sm:$0xff]
        %1908 = vst [vmem:[#allocation1] ss:$9 sm:$0xff] %v1356
        %1909 = vst [vmem:[%s1605] ss:$9 sm:$0xff] %v1357
        %1910 = vst [vmem:[%s1607] ss:$9 sm:$0xff] %v1358
        %1911 = vst [vmem:[%s1609] ss:$9 sm:$0xff] %v1359
        %1912 = vst [vmem:[%s1611] ss:$9 sm:$0xff] %v1360
        %1913 = vst [vmem:[%s1613] ss:$9 sm:$0xff] %v1361
        %1914 = vst [vmem:[%s1615] ss:$9 sm:$0xff] %v1362
        %1915 = vst [vmem:[%s1617] ss:$9 sm:$0xff] %v1363
        %v1916 = vld [vmem:[#allocation1] sm:$0xff]
        %1917 = vst [vmem:[#allocation1] ss:$9 sm:$0xff] %v1364
        %1918 = vst [vmem:[%s1605] ss:$9 sm:$0xff] %v1365
        %1919 = vst [vmem:[%s1607] ss:$9 sm:$0xff] %v1366
        %1920 = vst [vmem:[%s1609] ss:$9 sm:$0xff] %v1367
        %1921 = vst [vmem:[%s1611] ss:$9 sm:$0xff] %v1368
        %1922 = vst [vmem:[%s1613] ss:$9 sm:$0xff] %v1369
        %1923 = vst [vmem:[%s1615] ss:$9 sm:$0xff] %v1370
        %1924 = vst [vmem:[%s1617] ss:$9 sm:$0xff] %v1371
        %v1925 = vld [vmem:[#allocation1] sm:$0xff]
        %1926 = vst [vmem:[#allocation1] ss:$9 sm:$0xff] %v1372
        %1927 = vst [vmem:[%s1605] ss:$9 sm:$0xff] %v1373
        %1928 = vst [vmem:[%s1607] ss:$9 sm:$0xff] %v1374
        %1929 = vst [vmem:[%s1609] ss:$9 sm:$0xff] %v1375
        %1930 = vst [vmem:[%s1611] ss:$9 sm:$0xff] %v1376
        %1931 = vst [vmem:[%s1613] ss:$9 sm:$0xff] %v1377
        %1932 = vst [vmem:[%s1615] ss:$9 sm:$0xff] %v1378
        %1933 = vst [vmem:[%s1617] ss:$9 sm:$0xff] %v1379
        %v1934 = vld [vmem:[#allocation1] sm:$0xff]
        %1935 = vst [vmem:[#allocation1] ss:$9 sm:$0xff] %v1380
        %1936 = vst [vmem:[%s1605] ss:$9 sm:$0xff] %v1381
        %1937 = vst [vmem:[%s1607] ss:$9 sm:$0xff] %v1382
        %1938 = vst [vmem:[%s1609] ss:$9 sm:$0xff] %v1383
        %1939 = vst [vmem:[%s1611] ss:$9 sm:$0xff] %v1384
        %1940 = vst [vmem:[%s1613] ss:$9 sm:$0xff] %v1385
        %1941 = vst [vmem:[%s1615] ss:$9 sm:$0xff] %v1386
        %1942 = vst [vmem:[%s1617] ss:$9 sm:$0xff] %v1387
        %v1943 = vld [vmem:[#allocation1] sm:$0xff]
        %1944 = vst [vmem:[#allocation1] ss:$9 sm:$0xff] %v1388
        %1945 = vst [vmem:[%s1605] ss:$9 sm:$0xff] %v1389
        %1946 = vst [vmem:[%s1607] ss:$9 sm:$0xff] %v1390
        %1947 = vst [vmem:[%s1609] ss:$9 sm:$0xff] %v1391
        %1948 = vst [vmem:[%s1611] ss:$9 sm:$0xff] %v1392
        %1949 = vst [vmem:[%s1613] ss:$9 sm:$0xff] %v1393
        %1950 = vst [vmem:[%s1615] ss:$9 sm:$0xff] %v1394
        %1951 = vst [vmem:[%s1617] ss:$9 sm:$0xff] %v1395
        %v1952 = vld [vmem:[#allocation1] sm:$0xff]
        %1953 = vst [vmem:[#allocation1] ss:$9 sm:$0xff] %v1396
        %1954 = vst [vmem:[%s1605] ss:$9 sm:$0xff] %v1397
        %1955 = vst [vmem:[%s1607] ss:$9 sm:$0xff] %v1398
        %1956 = vst [vmem:[%s1609] ss:$9 sm:$0xff] %v1399
        %1957 = vst [vmem:[%s1611] ss:$9 sm:$0xff] %v1400
        %1958 = vst [vmem:[%s1613] ss:$9 sm:$0xff] %v1401
        %1959 = vst [vmem:[%s1615] ss:$9 sm:$0xff] %v1402
        %1960 = vst [vmem:[%s1617] ss:$9 sm:$0xff] %v1403
        %v1961 = vld [vmem:[#allocation1] sm:$0xff]
        %1962 = vst [vmem:[#allocation1] ss:$9 sm:$0xff] %v1404
        %1963 = vst [vmem:[%s1605] ss:$9 sm:$0xff] %v1405
        %1964 = vst [vmem:[%s1607] ss:$9 sm:$0xff] %v1406
        %1965 = vst [vmem:[%s1609] ss:$9 sm:$0xff] %v1407
        %1966 = vst [vmem:[%s1611] ss:$9 sm:$0xff] %v1408
        %1967 = vst [vmem:[%s1613] ss:$9 sm:$0xff] %v1409
        %1968 = vst [vmem:[%s1615] ss:$9 sm:$0xff] %v1410
        %1969 = vst [vmem:[%s1617] ss:$9 sm:$0xff] %v1411
        %v1970 = vld [vmem:[#allocation1] sm:$0xff]
        %1971 = vst [vmem:[#allocation1] ss:$9 sm:$0xff] %v1412
        %1972 = vst [vmem:[%s1605] ss:$9 sm:$0xff] %v1413
        %1973 = vst [vmem:[%s1607] ss:$9 sm:$0xff] %v1414
        %1974 = vst [vmem:[%s1609] ss:$9 sm:$0xff] %v1415
        %1975 = vst [vmem:[%s1611] ss:$9 sm:$0xff] %v1416
        %1976 = vst [vmem:[%s1613] ss:$9 sm:$0xff] %v1417
        %1977 = vst [vmem:[%s1615] ss:$9 sm:$0xff] %v1418
        %1978 = vst [vmem:[%s1617] ss:$9 sm:$0xff] %v1419
        %v1979 = vld [vmem:[#allocation1] sm:$0xff]
        %1980 = vst [vmem:[#allocation1] ss:$9 sm:$0xff] %v1420
        %1981 = vst [vmem:[%s1605] ss:$9 sm:$0xff] %v1421
        %1982 = vst [vmem:[%s1607] ss:$9 sm:$0xff] %v1422
        %1983 = vst [vmem:[%s1609] ss:$9 sm:$0xff] %v1423
        %1984 = vst [vmem:[%s1611] ss:$9 sm:$0xff] %v1424
        %1985 = vst [vmem:[%s1613] ss:$9 sm:$0xff] %v1425
        %1986 = vst [vmem:[%s1615] ss:$9 sm:$0xff] %v1426
        %1987 = vst [vmem:[%s1617] ss:$9 sm:$0xff] %v1427
        %v1988 = vld [vmem:[#allocation1] sm:$0xff]
        %1989 = vst [vmem:[#allocation1] ss:$9 sm:$0xff] %v1428
        %1990 = vst [vmem:[%s1605] ss:$9 sm:$0xff] %v1429
        %1991 = vst [vmem:[%s1607] ss:$9 sm:$0xff] %v1430
        %1992 = vst [vmem:[%s1609] ss:$9 sm:$0xff] %v1431
        %1993 = vst [vmem:[%s1611] ss:$9 sm:$0xff] %v1432
        %1994 = vst [vmem:[%s1613] ss:$9 sm:$0xff] %v1433
        %1995 = vst [vmem:[%s1615] ss:$9 sm:$0xff] %v1434
        %1996 = vst [vmem:[%s1617] ss:$9 sm:$0xff] %v1435
        %v1997 = vld [vmem:[#allocation1] sm:$0xff]
        %1998 = vst [vmem:[#allocation1] ss:$9 sm:$0xff] %v1436
        %1999 = vst [vmem:[%s1605] ss:$9 sm:$0xff] %v1437
        %2000 = vst [vmem:[%s1607] ss:$9 sm:$0xff] %v1438
        %2001 = vst [vmem:[%s1609] ss:$9 sm:$0xff] %v1439
        %2002 = vst [vmem:[%s1611] ss:$9 sm:$0xff] %v1440
        %2003 = vst [vmem:[%s1613] ss:$9 sm:$0xff] %v1441
        %2004 = vst [vmem:[%s1615] ss:$9 sm:$0xff] %v1442
        %2005 = vst [vmem:[%s1617] ss:$9 sm:$0xff] %v1443
        %v2006 = vld [vmem:[#allocation1] sm:$0xff]
        %2007 = vst [vmem:[#allocation1] ss:$9 sm:$0xff] %v1444
        %2008 = vst [vmem:[%s1605] ss:$9 sm:$0xff] %v1445
        %2009 = vst [vmem:[%s1607] ss:$9 sm:$0xff] %v1446
        %2010 = vst [vmem:[%s1609] ss:$9 sm:$0xff] %v1447
        %2011 = vst [vmem:[%s1611] ss:$9 sm:$0xff] %v1448
        %2012 = vst [vmem:[%s1613] ss:$9 sm:$0xff] %v1449
        %2013 = vst [vmem:[%s1615] ss:$9 sm:$0xff] %v1450
        %2014 = vst [vmem:[%s1617] ss:$9 sm:$0xff] %v1451
        %v2015 = vld [vmem:[#allocation1] sm:$0xff]
        %2016 = vst [vmem:[#allocation1] ss:$9 sm:$0xff] %v1452
        %2017 = vst [vmem:[%s1605] ss:$9 sm:$0xff] %v1453
        %2018 = vst [vmem:[%s1607] ss:$9 sm:$0xff] %v1454
        %2019 = vst [vmem:[%s1609] ss:$9 sm:$0xff] %v1455
        %2020 = vst [vmem:[%s1611] ss:$9 sm:$0xff] %v1456
        %2021 = vst [vmem:[%s1613] ss:$9 sm:$0xff] %v1457
        %2022 = vst [vmem:[%s1615] ss:$9 sm:$0xff] %v1458
        %2023 = vst [vmem:[%s1617] ss:$9 sm:$0xff] %v1459
        %v2024 = vld [vmem:[#allocation1] sm:$0xff]
        %2025 = vst [vmem:[#allocation1] ss:$9 sm:$0xff] %v1460
        %2026 = vst [vmem:[%s1605] ss:$9 sm:$0xff] %v1461
        %2027 = vst [vmem:[%s1607] ss:$9 sm:$0xff] %v1462
        %2028 = vst [vmem:[%s1609] ss:$9 sm:$0xff] %v1463
        %2029 = vst [vmem:[%s1611] ss:$9 sm:$0xff] %v1464
        %2030 = vst [vmem:[%s1613] ss:$9 sm:$0xff] %v1465
        %2031 = vst [vmem:[%s1615] ss:$9 sm:$0xff] %v1466
        %2032 = vst [vmem:[%s1617] ss:$9 sm:$0xff] %v1467
        %v2033 = vld [vmem:[#allocation1] sm:$0xff]
        %2034 = vst [vmem:[#allocation1] ss:$9 sm:$0xff] %v1468
        %2035 = vst [vmem:[%s1605] ss:$9 sm:$0xff] %v1469
        %2036 = vst [vmem:[%s1607] ss:$9 sm:$0xff] %v1470
        %2037 = vst [vmem:[%s1609] ss:$9 sm:$0xff] %v1471
        %2038 = vst [vmem:[%s1611] ss:$9 sm:$0xff] %v1472
        %2039 = vst [vmem:[%s1613] ss:$9 sm:$0xff] %v1473
        %2040 = vst [vmem:[%s1615] ss:$9 sm:$0xff] %v1474
        %2041 = vst [vmem:[%s1617] ss:$9 sm:$0xff] %v1475
        %v2042 = vld [vmem:[#allocation1] sm:$0xff]
        %2043 = vst [vmem:[#allocation1] ss:$9 sm:$0xff] %v1476
        %2044 = vst [vmem:[%s1605] ss:$9 sm:$0xff] %v1477
        %2045 = vst [vmem:[%s1607] ss:$9 sm:$0xff] %v1478
        %2046 = vst [vmem:[%s1609] ss:$9 sm:$0xff] %v1479
        %2047 = vst [vmem:[%s1611] ss:$9 sm:$0xff] %v1480
        %2048 = vst [vmem:[%s1613] ss:$9 sm:$0xff] %v1481
        %2049 = vst [vmem:[%s1615] ss:$9 sm:$0xff] %v1482
        %2050 = vst [vmem:[%s1617] ss:$9 sm:$0xff] %v1483
        %v2051 = vld [vmem:[#allocation1] sm:$0xff]
        %2052 = vst [vmem:[#allocation1] ss:$9 sm:$0xff] %v1484
        %2053 = vst [vmem:[%s1605] ss:$9 sm:$0xff] %v1485
        %2054 = vst [vmem:[%s1607] ss:$9 sm:$0xff] %v1486
        %2055 = vst [vmem:[%s1609] ss:$9 sm:$0xff] %v1487
        %2056 = vst [vmem:[%s1611] ss:$9 sm:$0xff] %v1488
        %2057 = vst [vmem:[%s1613] ss:$9 sm:$0xff] %v1489
        %2058 = vst [vmem:[%s1615] ss:$9 sm:$0xff] %v1490
        %2059 = vst [vmem:[%s1617] ss:$9 sm:$0xff] %v1491
        %v2060 = vld [vmem:[#allocation1] sm:$0xff]
        %2061 = vst [vmem:[#allocation1] ss:$9 sm:$0xff] %v1492
        %2062 = vst [vmem:[%s1605] ss:$9 sm:$0xff] %v1493
        %2063 = vst [vmem:[%s1607] ss:$9 sm:$0xff] %v1494
        %2064 = vst [vmem:[%s1609] ss:$9 sm:$0xff] %v1495
        %2065 = vst [vmem:[%s1611] ss:$9 sm:$0xff] %v1496
        %2066 = vst [vmem:[%s1613] ss:$9 sm:$0xff] %v1497
        %2067 = vst [vmem:[%s1615] ss:$9 sm:$0xff] %v1498
        %2068 = vst [vmem:[%s1617] ss:$9 sm:$0xff] %v1499
        %v2069 = vld [vmem:[#allocation1] sm:$0xff]
        %2070 = vst [vmem:[#allocation1] ss:$9 sm:$0xff] %v1500
        %2071 = vst [vmem:[%s1605] ss:$9 sm:$0xff] %v1501
        %2072 = vst [vmem:[%s1607] ss:$9 sm:$0xff] %v1502
        %2073 = vst [vmem:[%s1609] ss:$9 sm:$0xff] %v1503
        %2074 = vst [vmem:[%s1611] ss:$9 sm:$0xff] %v1504
        %2075 = vst [vmem:[%s1613] ss:$9 sm:$0xff] %v1505
        %2076 = vst [vmem:[%s1615] ss:$9 sm:$0xff] %v1506
        %2077 = vst [vmem:[%s1617] ss:$9 sm:$0xff] %v1507
        %v2078 = vld [vmem:[#allocation1] sm:$0xff]
        %2079 = vst [vmem:[#allocation1] ss:$9 sm:$0xff] %v1508
        %2080 = vst [vmem:[%s1605] ss:$9 sm:$0xff] %v1509
        %2081 = vst [vmem:[%s1607] ss:$9 sm:$0xff] %v1510
        %2082 = vst [vmem:[%s1609] ss:$9 sm:$0xff] %v1511
        %2083 = vst [vmem:[%s1611] ss:$9 sm:$0xff] %v1512
        %2084 = vst [vmem:[%s1613] ss:$9 sm:$0xff] %v1513
        %2085 = vst [vmem:[%s1615] ss:$9 sm:$0xff] %v1514
        %2086 = vst [vmem:[%s1617] ss:$9 sm:$0xff] %v1515
        %v2087 = vld [vmem:[#allocation1] sm:$0xff]
        %2088 = vst [vmem:[#allocation1] ss:$9 sm:$0xff] %v1516
        %2089 = vst [vmem:[%s1605] ss:$9 sm:$0xff] %v1517
        %2090 = vst [vmem:[%s1607] ss:$9 sm:$0xff] %v1518
        %2091 = vst [vmem:[%s1609] ss:$9 sm:$0xff] %v1519
        %2092 = vst [vmem:[%s1611] ss:$9 sm:$0xff] %v1520
        %2093 = vst [vmem:[%s1613] ss:$9 sm:$0xff] %v1521
        %2094 = vst [vmem:[%s1615] ss:$9 sm:$0xff] %v1522
        %2095 = vst [vmem:[%s1617] ss:$9 sm:$0xff] %v1523
        %v2096 = vld [vmem:[#allocation1] sm:$0xff]
        %2097 = vst [vmem:[#allocation1] ss:$9 sm:$0xff] %v1524
        %2098 = vst [vmem:[%s1605] ss:$9 sm:$0xff] %v1525
        %2099 = vst [vmem:[%s1607] ss:$9 sm:$0xff] %v1526
        %2100 = vst [vmem:[%s1609] ss:$9 sm:$0xff] %v1527
        %2101 = vst [vmem:[%s1611] ss:$9 sm:$0xff] %v1528
        %2102 = vst [vmem:[%s1613] ss:$9 sm:$0xff] %v1529
        %2103 = vst [vmem:[%s1615] ss:$9 sm:$0xff] %v1530
        %2104 = vst [vmem:[%s1617] ss:$9 sm:$0xff] %v1531
        %v2105 = vld [vmem:[#allocation1] sm:$0xff]
        %2106 = vst [vmem:[#allocation1] ss:$9 sm:$0xff] %v1532
        %2107 = vst [vmem:[%s1605] ss:$9 sm:$0xff] %v1533
        %2108 = vst [vmem:[%s1607] ss:$9 sm:$0xff] %v1534
        %2109 = vst [vmem:[%s1609] ss:$9 sm:$0xff] %v1535
        %2110 = vst [vmem:[%s1611] ss:$9 sm:$0xff] %v1536
        %2111 = vst [vmem:[%s1613] ss:$9 sm:$0xff] %v1537
        %2112 = vst [vmem:[%s1615] ss:$9 sm:$0xff] %v1538
        %2113 = vst [vmem:[%s1617] ss:$9 sm:$0xff] %v1539
        %v2114 = vld [vmem:[#allocation1] sm:$0xff]
        %2115 = vst [vmem:[#allocation1] ss:$9 sm:$0xff] %v1540
        %2116 = vst [vmem:[%s1605] ss:$9 sm:$0xff] %v1541
        %2117 = vst [vmem:[%s1607] ss:$9 sm:$0xff] %v1542
        %2118 = vst [vmem:[%s1609] ss:$9 sm:$0xff] %v1543
        %2119 = vst [vmem:[%s1611] ss:$9 sm:$0xff] %v1544
        %2120 = vst [vmem:[%s1613] ss:$9 sm:$0xff] %v1545
        %2121 = vst [vmem:[%s1615] ss:$9 sm:$0xff] %v1546
        %2122 = vst [vmem:[%s1617] ss:$9 sm:$0xff] %v1547
        %v2123 = vld [vmem:[#allocation1] sm:$0xff]
        %2124 = vst [vmem:[#allocation1] ss:$9 sm:$0xff] %v1548
        %2125 = vst [vmem:[%s1605] ss:$9 sm:$0xff] %v1549
        %2126 = vst [vmem:[%s1607] ss:$9 sm:$0xff] %v1550
        %2127 = vst [vmem:[%s1609] ss:$9 sm:$0xff] %v1551
        %2128 = vst [vmem:[%s1611] ss:$9 sm:$0xff] %v1552
        %2129 = vst [vmem:[%s1613] ss:$9 sm:$0xff] %v1553
        %2130 = vst [vmem:[%s1615] ss:$9 sm:$0xff] %v1554
        %2131 = vst [vmem:[%s1617] ss:$9 sm:$0xff] %v1555
        %v2132 = vld [vmem:[#allocation1] sm:$0xff]
        %2133 = vst [vmem:[#allocation1] ss:$9 sm:$0xff] %v1556
        %2134 = vst [vmem:[%s1605] ss:$9 sm:$0xff] %v1557
        %2135 = vst [vmem:[%s1607] ss:$9 sm:$0xff] %v1558
        %2136 = vst [vmem:[%s1609] ss:$9 sm:$0xff] %v1559
        %2137 = vst [vmem:[%s1611] ss:$9 sm:$0xff] %v1560
        %2138 = vst [vmem:[%s1613] ss:$9 sm:$0xff] %v1561
        %2139 = vst [vmem:[%s1615] ss:$9 sm:$0xff] %v1562
        %2140 = vst [vmem:[%s1617] ss:$9 sm:$0xff] %v1563
        %v2141 = vld [vmem:[#allocation1] sm:$0xff]
        %2142 = vst [vmem:[#allocation1] ss:$9 sm:$0xff] %v1564
        %2143 = vst [vmem:[%s1605] ss:$9 sm:$0xff] %v1565
        %2144 = vst [vmem:[%s1607] ss:$9 sm:$0xff] %v1566
        %2145 = vst [vmem:[%s1609] ss:$9 sm:$0xff] %v1567
        %2146 = vst [vmem:[%s1611] ss:$9 sm:$0xff] %v1568
        %2147 = vst [vmem:[%s1613] ss:$9 sm:$0xff] %v1569
        %2148 = vst [vmem:[%s1615] ss:$9 sm:$0xff] %v1570
        %2149 = vst [vmem:[%s1617] ss:$9 sm:$0xff] %v1571
        %v2150 = vld [vmem:[#allocation1] sm:$0xff]
        %2151 = vst [vmem:[#allocation1] ss:$9 sm:$0xff] %v1572
        %2152 = vst [vmem:[%s1605] ss:$9 sm:$0xff] %v1573
        %2153 = vst [vmem:[%s1607] ss:$9 sm:$0xff] %v1574
        %2154 = vst [vmem:[%s1609] ss:$9 sm:$0xff] %v1575
        %2155 = vst [vmem:[%s1611] ss:$9 sm:$0xff] %v1576
        %2156 = vst [vmem:[%s1613] ss:$9 sm:$0xff] %v1577
        %2157 = vst [vmem:[%s1615] ss:$9 sm:$0xff] %v1578
        %2158 = vst [vmem:[%s1617] ss:$9 sm:$0xff] %v1579
        %v2159 = vld [vmem:[#allocation1] sm:$0xff]
        %2160 = vst [vmem:[#allocation1] ss:$9 sm:$0xff] %v1580
        %2161 = vst [vmem:[%s1605] ss:$9 sm:$0xff] %v1581
        %2162 = vst [vmem:[%s1607] ss:$9 sm:$0xff] %v1582
        %2163 = vst [vmem:[%s1609] ss:$9 sm:$0xff] %v1583
        %2164 = vst [vmem:[%s1611] ss:$9 sm:$0xff] %v1584
        %2165 = vst [vmem:[%s1613] ss:$9 sm:$0xff] %v1585
        %2166 = vst [vmem:[%s1615] ss:$9 sm:$0xff] %v1586
        %2167 = vst [vmem:[%s1617] ss:$9 sm:$0xff] %v1587
        %v2168 = vld [vmem:[#allocation1] sm:$0xff]
        %2169 = vst [vmem:[#allocation1] ss:$9 sm:$0xff] %v1588
        %2170 = vst [vmem:[%s1605] ss:$9 sm:$0xff] %v1589
        %2171 = vst [vmem:[%s1607] ss:$9 sm:$0xff] %v1590
        %2172 = vst [vmem:[%s1609] ss:$9 sm:$0xff] %v1591
        %2173 = vst [vmem:[%s1611] ss:$9 sm:$0xff] %v1592
        %2174 = vst [vmem:[%s1613] ss:$9 sm:$0xff] %v1593
        %2175 = vst [vmem:[%s1615] ss:$9 sm:$0xff] %v1594
        %2176 = vst [vmem:[%s1617] ss:$9 sm:$0xff] %v1595
        %v2177 = vld [vmem:[#allocation1] sm:$0xff]
        %2178 = vst [vmem:[#allocation1] ss:$9 sm:$0xff] %v1596
        %2179 = vst [vmem:[%s1605] ss:$9 sm:$0xff] %v1597
        %2180 = vst [vmem:[%s1607] ss:$9 sm:$0xff] %v1598
        %2181 = vst [vmem:[%s1609] ss:$9 sm:$0xff] %v1599
        %2182 = vst [vmem:[%s1611] ss:$9 sm:$0xff] %v1600
        %2183 = vst [vmem:[%s1613] ss:$9 sm:$0xff] %v1601
        %2184 = vst [vmem:[%s1615] ss:$9 sm:$0xff] %v1602
        %2185 = vst [vmem:[%s1617] ss:$9 sm:$0xff] %v1603
        %v2186 = vld [vmem:[#allocation1] sm:$0xff]
        %2187 = vset.pattern.permute.xlu0 0
        %2188 = vperm.xlu0 %2187, %v1619
        %v2189 = vpop.permute.xlu0 %2188
        %2190 = vset.pattern.permute.xlu0 0
        %2191 = vperm.xlu0 %2190, %v1628
        %v2192 = vpop.permute.xlu0 %2191
        %2193 = vset.pattern.permute.xlu0 0
        %2194 = vperm.xlu0 %2193, %v1637
        %v2195 = vpop.permute.xlu0 %2194
        %2196 = vset.pattern.permute.xlu0 0
        %2197 = vperm.xlu0 %2196, %v1646
        %v2198 = vpop.permute.xlu0 %2197
        %2199 = vset.pattern.permute.xlu0 0
        %2200 = vperm.xlu0 %2199, %v1655
        %v2201 = vpop.permute.xlu0 %2200
        %2202 = vset.pattern.permute.xlu0 0
        %2203 = vperm.xlu0 %2202, %v1664
        %v2204 = vpop.permute.xlu0 %2203
        %2205 = vset.pattern.permute.xlu0 0
        %2206 = vperm.xlu0 %2205, %v1673
        %v2207 = vpop.permute.xlu0 %2206
        %2208 = vset.pattern.permute.xlu0 0
        %2209 = vperm.xlu0 %2208, %v1682
        %v2210 = vpop.permute.xlu0 %2209
        %2211 = vset.pattern.permute.xlu0 0
        %2212 = vperm.xlu0 %2211, %v1691
        %v2213 = vpop.permute.xlu0 %2212
        %2214 = vset.pattern.permute.xlu0 0
        %2215 = vperm.xlu0 %2214, %v1700
        %v2216 = vpop.permute.xlu0 %2215
        %2217 = vset.pattern.permute.xlu0 0
        %2218 = vperm.xlu0 %2217, %v1709
        %v2219 = vpop.permute.xlu0 %2218
        %2220 = vset.pattern.permute.xlu0 0
        %2221 = vperm.xlu0 %2220, %v1718
        %v2222 = vpop.permute.xlu0 %2221
        %2223 = vset.pattern.permute.xlu0 0
        %2224 = vperm.xlu0 %2223, %v1727
        %v2225 = vpop.permute.xlu0 %2224
        %2226 = vset.pattern.permute.xlu0 0
        %2227 = vperm.xlu0 %2226, %v1736
        %v2228 = vpop.permute.xlu0 %2227
        %2229 = vset.pattern.permute.xlu0 0
        %2230 = vperm.xlu0 %2229, %v1745
        %v2231 = vpop.permute.xlu0 %2230
        %2232 = vset.pattern.permute.xlu0 0
        %2233 = vperm.xlu0 %2232, %v1754
        %v2234 = vpop.permute.xlu0 %2233
        %2235 = vset.pattern.permute.xlu0 0
        %2236 = vperm.xlu0 %2235, %v1763
        %v2237 = vpop.permute.xlu0 %2236
        %2238 = vset.pattern.permute.xlu0 0
        %2239 = vperm.xlu0 %2238, %v1772
        %v2240 = vpop.permute.xlu0 %2239
        %2241 = vset.pattern.permute.xlu0 0
        %2242 = vperm.xlu0 %2241, %v1781
        %v2243 = vpop.permute.xlu0 %2242
        %2244 = vset.pattern.permute.xlu0 0
        %2245 = vperm.xlu0 %2244, %v1790
        %v2246 = vpop.permute.xlu0 %2245
        %2247 = vset.pattern.permute.xlu0 0
        %2248 = vperm.xlu0 %2247, %v1799
        %v2249 = vpop.permute.xlu0 %2248
        %2250 = vset.pattern.permute.xlu0 0
        %2251 = vperm.xlu0 %2250, %v1808
        %v2252 = vpop.permute.xlu0 %2251
        %2253 = vset.pattern.permute.xlu0 0
        %2254 = vperm.xlu0 %2253, %v1817
        %v2255 = vpop.permute.xlu0 %2254
        %2256 = vset.pattern.permute.xlu0 0
        %2257 = vperm.xlu0 %2256, %v1826
        %v2258 = vpop.permute.xlu0 %2257
        %2259 = vset.pattern.permute.xlu0 0
        %2260 = vperm.xlu0 %2259, %v1835
        %v2261 = vpop.permute.xlu0 %2260
        %2262 = vset.pattern.permute.xlu0 0
        %2263 = vperm.xlu0 %2262, %v1844
        %v2264 = vpop.permute.xlu0 %2263
        %2265 = vset.pattern.permute.xlu0 0
        %2266 = vperm.xlu0 %2265, %v1853
        %v2267 = vpop.permute.xlu0 %2266
        %2268 = vset.pattern.permute.xlu0 0
        %2269 = vperm.xlu0 %2268, %v1862
        %v2270 = vpop.permute.xlu0 %2269
        %2271 = vset.pattern.permute.xlu0 0
        %2272 = vperm.xlu0 %2271, %v1871
        %v2273 = vpop.permute.xlu0 %2272
        %2274 = vset.pattern.permute.xlu0 0
        %2275 = vperm.xlu0 %2274, %v1880
        %v2276 = vpop.permute.xlu0 %2275
        %2277 = vset.pattern.permute.xlu0 0
        %2278 = vperm.xlu0 %2277, %v1889
        %v2279 = vpop.permute.xlu0 %2278
        %2280 = vset.pattern.permute.xlu0 0
        %2281 = vperm.xlu0 %2280, %v1898
        %v2282 = vpop.permute.xlu0 %2281
        %2283 = vset.pattern.permute.xlu0 0
        %2284 = vperm.xlu0 %2283, %v1907
        %v2285 = vpop.permute.xlu0 %2284
        %2286 = vset.pattern.permute.xlu0 0
        %2287 = vperm.xlu0 %2286, %v1916
        %v2288 = vpop.permute.xlu0 %2287
        %2289 = vset.pattern.permute.xlu0 0
        %2290 = vperm.xlu0 %2289, %v1925
        %v2291 = vpop.permute.xlu0 %2290
        %2292 = vset.pattern.permute.xlu0 0
        %2293 = vperm.xlu0 %2292, %v1934
        %v2294 = vpop.permute.xlu0 %2293
        %2295 = vset.pattern.permute.xlu0 0
        %2296 = vperm.xlu0 %2295, %v1943
        %v2297 = vpop.permute.xlu0 %2296
        %2298 = vset.pattern.permute.xlu0 0
        %2299 = vperm.xlu0 %2298, %v1952
        %v2300 = vpop.permute.xlu0 %2299
        %2301 = vset.pattern.permute.xlu0 0
        %2302 = vperm.xlu0 %2301, %v1961
        %v2303 = vpop.permute.xlu0 %2302
        %2304 = vset.pattern.permute.xlu0 0
        %2305 = vperm.xlu0 %2304, %v1970
        %v2306 = vpop.permute.xlu0 %2305
        %2307 = vset.pattern.permute.xlu0 0
        %2308 = vperm.xlu0 %2307, %v1979
        %v2309 = vpop.permute.xlu0 %2308
        %2310 = vset.pattern.permute.xlu0 0
        %2311 = vperm.xlu0 %2310, %v1988
        %v2312 = vpop.permute.xlu0 %2311
        %2313 = vset.pattern.permute.xlu0 0
        %2314 = vperm.xlu0 %2313, %v1997
        %v2315 = vpop.permute.xlu0 %2314
        %2316 = vset.pattern.permute.xlu0 0
        %2317 = vperm.xlu0 %2316, %v2006
        %v2318 = vpop.permute.xlu0 %2317
        %2319 = vset.pattern.permute.xlu0 0
        %2320 = vperm.xlu0 %2319, %v2015
        %v2321 = vpop.permute.xlu0 %2320
        %2322 = vset.pattern.permute.xlu0 0
        %2323 = vperm.xlu0 %2322, %v2024
        %v2324 = vpop.permute.xlu0 %2323
        %2325 = vset.pattern.permute.xlu0 0
        %2326 = vperm.xlu0 %2325, %v2033
        %v2327 = vpop.permute.xlu0 %2326
        %2328 = vset.pattern.permute.xlu0 0
        %2329 = vperm.xlu0 %2328, %v2042
        %v2330 = vpop.permute.xlu0 %2329
        %2331 = vset.pattern.permute.xlu0 0
        %2332 = vperm.xlu0 %2331, %v2051
        %v2333 = vpop.permute.xlu0 %2332
        %2334 = vset.pattern.permute.xlu0 0
        %2335 = vperm.xlu0 %2334, %v2060
        %v2336 = vpop.permute.xlu0 %2335
        %2337 = vset.pattern.permute.xlu0 0
        %2338 = vperm.xlu0 %2337, %v2069
        %v2339 = vpop.permute.xlu0 %2338
        %2340 = vset.pattern.permute.xlu0 0
        %2341 = vperm.xlu0 %2340, %v2078
        %v2342 = vpop.permute.xlu0 %2341
        %2343 = vset.pattern.permute.xlu0 0
        %2344 = vperm.xlu0 %2343, %v2087
        %v2345 = vpop.permute.xlu0 %2344
        %2346 = vset.pattern.permute.xlu0 0
        %2347 = vperm.xlu0 %2346, %v2096
        %v2348 = vpop.permute.xlu0 %2347
        %2349 = vset.pattern.permute.xlu0 0
        %2350 = vperm.xlu0 %2349, %v2105
        %v2351 = vpop.permute.xlu0 %2350
        %2352 = vset.pattern.permute.xlu0 0
        %2353 = vperm.xlu0 %2352, %v2114
        %v2354 = vpop.permute.xlu0 %2353
        %2355 = vset.pattern.permute.xlu0 0
        %2356 = vperm.xlu0 %2355, %v2123
        %v2357 = vpop.permute.xlu0 %2356
        %2358 = vset.pattern.permute.xlu0 0
        %2359 = vperm.xlu0 %2358, %v2132
        %v2360 = vpop.permute.xlu0 %2359
        %2361 = vset.pattern.permute.xlu0 0
        %2362 = vperm.xlu0 %2361, %v2141
        %v2363 = vpop.permute.xlu0 %2362
        %2364 = vset.pattern.permute.xlu0 0
        %2365 = vperm.xlu0 %2364, %v2150
        %v2366 = vpop.permute.xlu0 %2365
        %2367 = vset.pattern.permute.xlu0 0
        %2368 = vperm.xlu0 %2367, %v2159
        %v2369 = vpop.permute.xlu0 %2368
        %2370 = vset.pattern.permute.xlu0 0
        %2371 = vperm.xlu0 %2370, %v2168
        %v2372 = vpop.permute.xlu0 %2371
        %2373 = vset.pattern.permute.xlu0 0
        %2374 = vperm.xlu0 %2373, %v2177
        %v2375 = vpop.permute.xlu0 %2374
        %2376 = vset.pattern.permute.xlu0 0
        %2377 = vperm.xlu0 %2376, %v2186
        %v2378 = vpop.permute.xlu0 %2377
        %v2379 = vlaneseq
        %v2380 = vand.u32 %v2379, 127
        %v2381 = vperm.slane %v2189, %v2380
        %v2382 = vadd.s32 %v2380, 4294967288
        %v2383 = vperm.slane %v2192, %v2382
        %vm2384 = vcmask 130112
        %v2385 = vsel %vm2384, %v2383, %v2381
        %v2386 = vadd.s32 %v2380, 4294967280
        %v2387 = vperm.slane %v2195, %v2386
        %vm2388 = vcmask 195712
        %v2389 = vsel %vm2388, %v2387, %v2385
        %v2390 = vadd.s32 %v2380, 4294967272
        %v2391 = vperm.slane %v2198, %v2390
        %vm2392 = vcmask 261312
        %v2393 = vsel %vm2392, %v2391, %v2389
        %v2394 = vadd.s32 %v2380, 4294967264
        %v2395 = vperm.slane %v2201, %v2394
        %vm2396 = vcmask 326912
        %v2397 = vsel %vm2396, %v2395, %v2393
        %v2398 = vadd.s32 %v2380, 4294967256
        %v2399 = vperm.slane %v2204, %v2398
        %vm2400 = vcmask 392512
        %v2401 = vsel %vm2400, %v2399, %v2397
        %v2402 = vadd.s32 %v2380, 4294967248
        %v2403 = vperm.slane %v2207, %v2402
        %vm2404 = vcmask 458112
        %v2405 = vsel %vm2404, %v2403, %v2401
        %v2406 = vadd.s32 %v2380, 4294967240
        %v2407 = vperm.slane %v2210, %v2406
        %vm2408 = vcmask 523712
        %v2409 = vsel %vm2408, %v2407, %v2405
        %v2410 = vadd.s32 %v2380, 4294967232
        %v2411 = vperm.slane %v2213, %v2410
        %vm2412 = vcmask 589312
        %v2413 = vsel %vm2412, %v2411, %v2409
        %v2414 = vadd.s32 %v2380, 4294967224
        %v2415 = vperm.slane %v2216, %v2414
        %vm2416 = vcmask 654912
        %v2417 = vsel %vm2416, %v2415, %v2413
        %v2418 = vadd.s32 %v2380, 4294967216
        %v2419 = vperm.slane %v2219, %v2418
        %vm2420 = vcmask 720512
        %v2421 = vsel %vm2420, %v2419, %v2417
        %v2422 = vadd.s32 %v2380, 4294967208
        %v2423 = vperm.slane %v2222, %v2422
        %vm2424 = vcmask 786112
        %v2425 = vsel %vm2424, %v2423, %v2421
        %v2426 = vadd.s32 %v2380, 4294967200
        %v2427 = vperm.slane %v2225, %v2426
        %vm2428 = vcmask 851712
        %v2429 = vsel %vm2428, %v2427, %v2425
        %v2430 = vadd.s32 %v2380, 4294967192
        %v2431 = vperm.slane %v2228, %v2430
        %vm2432 = vcmask 917312
        %v2433 = vsel %vm2432, %v2431, %v2429
        %v2434 = vadd.s32 %v2380, 4294967184
        %v2435 = vperm.slane %v2231, %v2434
        %vm2436 = vcmask 982912
        %v2437 = vsel %vm2436, %v2435, %v2433
        %v2438 = vadd.s32 %v2380, 4294967176
        %v2439 = vperm.slane %v2234, %v2438
        %vm2440 = vcmask 1048512
        %v2441 = vsel %vm2440, %v2439, %v2437
        %v2442 = vperm.slane %v2237, %v2380
        %v2443 = vperm.slane %v2240, %v2382
        %v2444 = vsel %vm2384, %v2443, %v2442
        %v2445 = vperm.slane %v2243, %v2386
        %v2446 = vsel %vm2388, %v2445, %v2444
        %v2447 = vperm.slane %v2246, %v2390
        %v2448 = vsel %vm2392, %v2447, %v2446
        %v2449 = vperm.slane %v2249, %v2394
        %v2450 = vsel %vm2396, %v2449, %v2448
        %v2451 = vperm.slane %v2252, %v2398
        %v2452 = vsel %vm2400, %v2451, %v2450
        %v2453 = vperm.slane %v2255, %v2402
        %v2454 = vsel %vm2404, %v2453, %v2452
        %v2455 = vperm.slane %v2258, %v2406
        %v2456 = vsel %vm2408, %v2455, %v2454
        %v2457 = vperm.slane %v2261, %v2410
        %v2458 = vsel %vm2412, %v2457, %v2456
        %v2459 = vperm.slane %v2264, %v2414
        %v2460 = vsel %vm2416, %v2459, %v2458
        %v2461 = vperm.slane %v2267, %v2418
        %v2462 = vsel %vm2420, %v2461, %v2460
        %v2463 = vperm.slane %v2270, %v2422
        %v2464 = vsel %vm2424, %v2463, %v2462
        %v2465 = vperm.slane %v2273, %v2426
        %v2466 = vsel %vm2428, %v2465, %v2464
        %v2467 = vperm.slane %v2276, %v2430
        %v2468 = vsel %vm2432, %v2467, %v2466
        %v2469 = vperm.slane %v2279, %v2434
        %v2470 = vsel %vm2436, %v2469, %v2468
        %v2471 = vperm.slane %v2282, %v2438
        %v2472 = vsel %vm2440, %v2471, %v2470
        %v2473 = vperm.slane %v2285, %v2380
        %v2474 = vperm.slane %v2288, %v2382
        %v2475 = vsel %vm2384, %v2474, %v2473
        %v2476 = vperm.slane %v2291, %v2386
        %v2477 = vsel %vm2388, %v2476, %v2475
        %v2478 = vperm.slane %v2294, %v2390
        %v2479 = vsel %vm2392, %v2478, %v2477
        %v2480 = vperm.slane %v2297, %v2394
        %v2481 = vsel %vm2396, %v2480, %v2479
        %v2482 = vperm.slane %v2300, %v2398
        %v2483 = vsel %vm2400, %v2482, %v2481
        %v2484 = vperm.slane %v2303, %v2402
        %v2485 = vsel %vm2404, %v2484, %v2483
        %v2486 = vperm.slane %v2306, %v2406
        %v2487 = vsel %vm2408, %v2486, %v2485
        %v2488 = vperm.slane %v2309, %v2410
        %v2489 = vsel %vm2412, %v2488, %v2487
        %v2490 = vperm.slane %v2312, %v2414
        %v2491 = vsel %vm2416, %v2490, %v2489
        %v2492 = vperm.slane %v2315, %v2418
        %v2493 = vsel %vm2420, %v2492, %v2491
        %v2494 = vperm.slane %v2318, %v2422
        %v2495 = vsel %vm2424, %v2494, %v2493
        %v2496 = vperm.slane %v2321, %v2426
        %v2497 = vsel %vm2428, %v2496, %v2495
        %v2498 = vperm.slane %v2324, %v2430
        %v2499 = vsel %vm2432, %v2498, %v2497
        %v2500 = vperm.slane %v2327, %v2434
        %v2501 = vsel %vm2436, %v2500, %v2499
        %v2502 = vperm.slane %v2330, %v2438
        %v2503 = vsel %vm2440, %v2502, %v2501
        %v2504 = vperm.slane %v2333, %v2380
        %v2505 = vperm.slane %v2336, %v2382
        %v2506 = vsel %vm2384, %v2505, %v2504
        %v2507 = vperm.slane %v2339, %v2386
        %v2508 = vsel %vm2388, %v2507, %v2506
        %v2509 = vperm.slane %v2342, %v2390
        %v2510 = vsel %vm2392, %v2509, %v2508
        %v2511 = vperm.slane %v2345, %v2394
        %v2512 = vsel %vm2396, %v2511, %v2510
        %v2513 = vperm.slane %v2348, %v2398
        %v2514 = vsel %vm2400, %v2513, %v2512
        %v2515 = vperm.slane %v2351, %v2402
        %v2516 = vsel %vm2404, %v2515, %v2514
        %v2517 = vperm.slane %v2354, %v2406
        %v2518 = vsel %vm2408, %v2517, %v2516
        %v2519 = vperm.slane %v2357, %v2410
        %v2520 = vsel %vm2412, %v2519, %v2518
        %v2521 = vperm.slane %v2360, %v2414
        %v2522 = vsel %vm2416, %v2521, %v2520
        %v2523 = vperm.slane %v2363, %v2418
        %v2524 = vsel %vm2420, %v2523, %v2522
        %v2525 = vperm.slane %v2366, %v2422
        %v2526 = vsel %vm2424, %v2525, %v2524
        %v2527 = vperm.slane %v2369, %v2426
        %v2528 = vsel %vm2428, %v2527, %v2526
        %v2529 = vperm.slane %v2372, %v2430
        %v2530 = vsel %vm2432, %v2529, %v2528
        %v2531 = vperm.slane %v2375, %v2434
        %v2532 = vsel %vm2436, %v2531, %v2530
        %v2533 = vperm.slane %v2378, %v2438
        %v2534 = vsel %vm2440, %v2533, %v2532
        %v2535 = vrot.slane %v2472, 7
        %v2536 = vrot.slane %v2503, 6
        %v2537 = vrot.slane %v2534, 5
        %vm2538 = vcmask 1040384
        %v2539 = vsel %vm2538, %v2441, %v2535
        %vm2540 = vcmask 1042434
        %v2541 = vsel %vm2540, %v2536, %v2537
        %vm2542 = vcmask 1041408
        %v2543 = vsel %vm2542, %v2539, %v2541
        %v2545 = vlaneseq
        %vm2546 = vcmp.ge.s32.totalorder %v2545, 0
        %vm2547 = vcmp.lt.s32.totalorder %v2545, 512
        %vm2548 = vmand %vm2546, %vm2547
        %2549 = vst.msk [vmem:[%s219] sm:$0xf] %vm2548, %v2543
        %s2550 = sand.u32 %s138, 1
        %s2551 = scalar_lea.sflag [#allocation4], %s2550
        %s2552 = sand.u32 %s138, 1
        %s2553 = smul.addr %s2552, 4
        %s2554 = scalar_lea.vmem [#allocation3], %s2553
        // Predicated region
        $region41: #{value_net_forward.1} parent=39 // pred_check
          %p2555 = pneg %p148
        $region42: #{value_net_forward.1} parent=39 // pred_check_branch
          %2557 = sbr.rel (%p2555) target = $region44
        $region43: #{value_net_forward.1} parent=39 // pred_region
          %s2558 = smul.u32 4, %s20
          %2560 = vsyncadd %s2551, 0
          %s2561 = scalar_lea.hbm %s5, %s2558
          %s2563 = sshll.u32 %s2554, 4
          %s2564 = int_to_ptr.vmem [resolvable:$true] %s2563
          %s2565 = sshll.u32 %s2561, 4
          %s2566 = int_to_ptr.hbm [resolvable:$true] %s2565
          %2568 = dma.vmem_to_hbm [thread:$0]  %s2564, 64, %s2566, %s2551
        $region44: #{value_net_forward.1} parent=39 // pred_fallthru
          _
      $region40: #{value_net_forward.1} parent=5 // pred_fallthru
        _
      %p2569 = scmp.le.s32.totalorder 2, %s15
      // Predicated region
      $region45: #{value_net_forward.1} parent=5 // pred_check
        %p2570 = pneg %p2569
      $region46: #{value_net_forward.1} parent=5 // pred_check_branch
        %2572 = sbr.rel (%p2570) target = $region48
      $region47: #{value_net_forward.1} parent=5 // pred_region
        %s2573 = ssub.s32 %s15, 2
        // Predicated region
        $region49: #{value_net_forward.1} parent=47 // pred_check
          %p2574 = pneg %p154
        $region50: #{value_net_forward.1} parent=47 // pred_check_branch
          %2576 = sbr.rel (%p2574) target = $region52
        $region51: #{value_net_forward.1} parent=47 // pred_region
          %s2577 = sand.u32 %s139, 1
          %s2578 = scalar_lea.sflag [#allocation4], %s2577
          %s2579 = sand.u32 %s139, 1
          %s2580 = smul.addr %s2579, 4
          %s2581 = scalar_lea.vmem [#allocation3], %s2580
          %2583 = dma.done %s2578, 64
        $region52: #{value_net_forward.1} parent=47 // pred_fallthru
          _
      $region48: #{value_net_forward.1} parent=5 // pred_fallthru
        _
    $region6: #{value_net_forward.1} parent=1 // loop_footer
      %s19 = sadd.s32 1, %s15
    $region7: #{value_net_forward.1} parent=1 // loop_footer_branch
      %14 = sbr.rel target = $region3
    $region8: #{value_net_forward.1} parent=1 // loop_exit
      _
    %2584 = vsyncpa [#allocation4], 1
    %s2585 = scalar_lea.sflag [#allocation4], 1
    %2586 = vsyncpa %s2585, 1

</llo_original>
